<compile_context>
chip_gen: v5e
topology: v5e:2x2
jax: 0.10.0
libtpu: 0.0.40
codegen_flags: <defaults>
</compile_context>

<pallas_src>
import math
import jax
import jax.numpy as jnp
from jax.experimental import pallas as pl
from jax.experimental.pallas import tpu as pltpu

# ---------------- module defaults (small N for the demo) --------------------
CONDITIONS = ("Structured3D", "ScanNet", "S3DIS")
VALID_INDEX = (
    (0, 1, 2, 3, 4, 5, 6, 7, 8, 11, 13, 14, 15, 16, 17, 18, 19, 20, 21, 23,
     25, 26, 33, 34, 35),
    (0, 1, 2, 3, 4, 5, 6, 7, 8, 9, 11, 12, 13, 15, 20, 22, 24, 25, 27, 34),
    (0, 1, 4, 5, 6, 7, 8, 10, 19, 29, 30, 31, 32),
)
NUM_CLASS_NAMES = 36          # len(class_name)
CLIP_DIM = 512                # ViT-B/16 text embedding dim
CONTEXT_CHANNELS = 256        # context_channels
IN_CHANNELS = 6               # c_in_channels (point color+normal feats)
MAX_TN = 2048                 # point-axis tile (amortizes ~0.35us/step overhead)
K_PAD = 128                   # lane-dense padded class count (>= max K = 25)


def _pick_tile(n):
    """Largest tile <= MAX_TN, shrunk (floor 256) so small point clouds still
    yield several grid tiles (>=2 per TensorCore on v7x megacore)."""
    tn = MAX_TN
    while tn > 256 and (n + tn - 1) // tn < 4:
        tn //= 2
    return tn


# ---------------------------- fused Pallas kernel ----------------------------
def _ppt_fused_kernel(x_ref, w_ref, clsT_ref, o_ref):
    # TODO(synk): the real backbone is an externally built SpUNet-v1m3/PT-v3m1
    # sparse-conv model; this is a minimal context-conditioned linear stand-in
    # so the data-driven-context path (embedding_table -> backbone) runs.
    # bf16 operands, f32 accumulation (bf16-native MXU on v5e/v6e/v7x).
    h = jnp.dot(x_ref[...], w_ref[...],
                preferred_element_type=jnp.float32)          # (TN, D) f32
    h = jnp.maximum(h, 0.0)                                  # relu, f32 VPU

    # feat = feat / feat.norm(dim=-1, keepdim=True) applied as a per-row
    # post-scale on the logits (mathematically identical; 4x fewer scaled
    # elements).  Rows with all-zero h give rsqrt(0)=inf -> 0*inf = NaN,
    # matching torch's eps-free divide; in practice only the zero-padded tail
    # rows can hit this and they are sliced off in the wrapper.
    sumsq = jnp.sum(h * h, axis=-1, keepdims=True)           # (TN, 1) f32
    inv_norm = jax.lax.rsqrt(sumsq)                          # EUP slot

    # seg_logits = exp(logit_scale) * (fn @ class_emb[valid].T)
    # (scale folded into clsT in f32 before the bf16 cast; zero-padded
    #  columns produce exact-zero logits and are sliced off in JAX)
    logits = jnp.dot(h.astype(jnp.bfloat16), clsT_ref[...],
                     preferred_element_type=jnp.float32)     # (TN, K_PAD) f32
    o_ref[...] = (logits * inv_norm).astype(o_ref.dtype)     # bf16 store


# ------------------------------ wrapper --------------------------------------
def ppt_fused(x, w, ctx_bias, clsT_scaled):
    """x: (N, C) f32 points, w: (C, D), ctx_bias: (1, D), clsT_scaled: (D, K_PAD).
    Returns (N, K_PAD) bf16 logits; only the first K columns are meaningful."""
    N, C = x.shape
    D = w.shape[1]
    Kp = clsT_scaled.shape[1]

    # Fold the context bias into the matmul: [x | 1] @ [W ; ctx_bias].
    x_aug = jnp.concatenate([x, jnp.ones((N, 1), x.dtype)], axis=1)   # (N, C+1)
    w_aug = jnp.concatenate([w, ctx_bias], axis=0)                    # (C+1, D)

    # Pad channels to a multiple of 16 (bf16 sublane packing) and points to a
    # multiple of the tile. Padded tail rows are all-zero -> NaN logits
    # (rsqrt(0)); harmless because they are sliced off below.
    Ca = C + 1
    pad_c = (-Ca) % 16
    tn = _pick_tile(N)
    pad_n = (-N) % tn
    xp = jnp.pad(x_aug, ((0, pad_n), (0, pad_c))).astype(jnp.bfloat16)
    wp = jnp.pad(w_aug, ((0, pad_c), (0, 0))).astype(jnp.bfloat16)
    clsT_bf = clsT_scaled.astype(jnp.bfloat16)
    Cp, Np = Ca + pad_c, N + pad_n

    cost = pl.CostEstimate(
        flops=2 * Np * Cp * D + 2 * Np * D * Kp,
        transcendentals=Np,
        bytes_accessed=Np * Cp * 2 + Cp * D * 2 + D * Kp * 2 + Np * Kp * 2,
    )

    out = pl.pallas_call(
        _ppt_fused_kernel,
        out_shape=jax.ShapeDtypeStruct((Np, Kp), jnp.bfloat16),
        grid_spec=pltpu.PrefetchScalarGridSpec(
            num_scalar_prefetch=0,
            grid=(pl.cdiv(Np, tn),),
            in_specs=[
                pl.BlockSpec((tn, Cp), lambda i: (i, 0)),
                pl.BlockSpec((Cp, D), lambda i: (0, 0)),
                pl.BlockSpec((D, Kp), lambda i: (0, 0)),
            ],
            out_specs=pl.BlockSpec((tn, Kp), lambda i: (i, 0)),
        ),
        compiler_params=pltpu.CompilerParams(
            dimension_semantics=("parallel",)),
        cost_estimate=cost,
    )(xp, wp, clsT_bf)
    return out[:N]


def ppt_forward(params, input_dict):
    """Mirrors PointPromptTraining.forward with condition=False, dm=False,
    backbone_mode=False (the default configuration)."""
    condition = input_dict["condition"][0]
    assert condition in CONDITIONS
    cond_idx = CONDITIONS.index(condition)

    # nn.Embedding lookup -> data-driven context (glue), then hoist the
    # grid-invariant context projection out of the kernel as a (1, D) bias
    # that gets folded into the backbone weight matrix.
    context = params["embedding_table"][cond_idx][None, :]          # (1, 256)
    ctx_bias = context @ params["backbone_wc"]                      # (1, 512)

    # Language-head constants: gather valid rows, fold exp(logit_scale) in f32,
    # transpose to (D, K) and zero-pad K up to 128 for a lane-dense output.
    valid = jnp.asarray(VALID_INDEX[cond_idx], dtype=jnp.int32)
    K = len(VALID_INDEX[cond_idx])
    cls_valid = params["class_embedding"][valid]                    # (K, 512)
    clsT = (jnp.exp(params["logit_scale"]) * cls_valid).T           # (512, K)
    clsT_padded = jnp.pad(clsT, ((0, 0), (0, K_PAD - K)))           # (512, 128)

    logits_full = ppt_fused(input_dict["feat"], params["backbone_w"],
                            ctx_bias, clsT_padded)                  # (N,128) bf16
    # NOTE: raw (N, 128) output has zero-padded columns; slice before use.
    seg_logits = logits_full[:, :K].astype(jnp.float32)             # (N, K) f32

    # TODO(synk): `criteria` is an externally built loss (build_criteria,
    # loss_type='EW'); a plain mean cross-entropy stand-in is computed in JAX.
    segment = input_dict["segment"]
    logp = jax.nn.log_softmax(seg_logits, axis=-1)
    loss = -jnp.mean(jnp.take_along_axis(logp, segment[:, None], axis=-1))
    return dict(loss=loss, seg_logits=seg_logits)


# --------------------------------- main --------------------------------------
if __name__ == "__main__":
    key = jax.random.PRNGKey(0)
    k1, k2, k3, k4, k5, k6 = jax.random.split(key, 6)

    N = 256
    condition = "ScanNet"
    cond_idx = CONDITIONS.index(condition)
    K = len(VALID_INDEX[cond_idx])

    # example inputs
    feat = jax.random.normal(k1, (N, IN_CHANNELS), dtype=jnp.float32)
    segment = jax.random.randint(k2, (N,), 0, K, dtype=jnp.int32)

    # deterministic parameters (shapes from __init__)
    emb_table = 0.02 * jax.random.normal(
        k3, (len(CONDITIONS), CONTEXT_CHANNELS), jnp.float32)       # Embedding(3, 256)
    backbone_w = 0.1 * jax.random.normal(
        k4, (IN_CHANNELS, CLIP_DIM), jnp.float32)
    backbone_wc = 0.05 * jax.random.normal(
        k5, (CONTEXT_CHANNELS, CLIP_DIM), jnp.float32)
    class_embedding = jax.random.normal(
        k6, (NUM_CLASS_NAMES, CLIP_DIM), jnp.float32)               # CLIP text embeds
    class_embedding = class_embedding / jnp.linalg.norm(
        class_embedding, axis=-1, keepdims=True)
    logit_scale = jnp.float32(math.log(1.0 / 0.07))                 # CLIP init

    params = dict(embedding_table=emb_table, backbone_w=backbone_w,
                  backbone_wc=backbone_wc, class_embedding=class_embedding,
                  logit_scale=logit_scale)
    input_dict = dict(feat=feat, segment=segment, condition=[condition])

    out = ppt_forward(params, input_dict)
    jax.block_until_ready(out["seg_logits"])
    jax.block_until_ready(out["loss"])

    # sanity check vs plain-JAX f32 reference (same math as the torch module);
    # tolerances loosened for bf16 MXU operands + bf16 logit store.
    ctx = emb_table[cond_idx][None, :]
    ref_feat = jnp.maximum(feat @ backbone_w + ctx @ backbone_wc, 0.0)
    ref_feat = ref_feat / jnp.linalg.norm(ref_feat, axis=-1, keepdims=True)
    ref_logits = jnp.exp(logit_scale) * (
        ref_feat @ class_embedding[jnp.asarray(VALID_INDEX[cond_idx])].T)
    assert out["seg_logits"].shape == (N, K)
    assert out["seg_logits"].dtype == jnp.float32
    assert jnp.allclose(out["seg_logits"], ref_logits, atol=1e-1, rtol=5e-2)
    assert jnp.isfinite(out["loss"])

    print("KERNEL_OK")
</pallas_src>

<mosaic_0001>
module attributes {stable_mosaic.version = 11 : i64} {
  func.func @_ppt_fused_kernel(%arg0: i32, %arg1: memref<256x16xbf16, #tpu.memory_space<vmem>>, %arg2: memref<16x512xbf16, #tpu.memory_space<vmem>>, %arg3: memref<512x128xbf16, #tpu.memory_space<vmem>>, %arg4: memref<256x128xbf16, #tpu.memory_space<vmem>>) attributes {dimension_semantics = [#tpu.dimension_semantics<parallel>], iteration_bounds = array<i64: 1>, scalar_prefetch = 0 : i64, scratch_operands = 0 : i64, tpu.core_type = #tpu.core_type<tc>, window_params = [{transform_indices = @transform_0, window_bounds = array<i64: 256, 16>}, {pipeline_mode = #tpu.pipeline_mode<synchronous>, transform_indices = @transform_1, window_bounds = array<i64: 16, 512>}, {pipeline_mode = #tpu.pipeline_mode<synchronous>, transform_indices = @transform_2, window_bounds = array<i64: 512, 128>}, {transform_indices = @transform_3, window_bounds = array<i64: 256, 128>}]} {
    %c0 = arith.constant 0 : index
    %c0_0 = arith.constant 0 : index
    %0 = vector.load %arg1[%c0, %c0_0] : memref<256x16xbf16, #tpu.memory_space<vmem>>, vector<256x16xbf16>
    %c0_1 = arith.constant 0 : index
    %c0_2 = arith.constant 0 : index
    %1 = vector.load %arg2[%c0_1, %c0_2] : memref<16x512xbf16, #tpu.memory_space<vmem>>, vector<16x512xbf16>
    %cst = arith.constant dense<0.000000e+00> : vector<256x512xf32>
    %2 = tpu.matmul %0, %1, %cst {dimension_numbers = #tpu.dot_dimension_numbers<[1], [0], [0], [1], [0, 0, 1, 1], [], []>} : vector<256x16xbf16>, vector<16x512xbf16>, vector<256x512xf32> -> vector<256x512xf32>
    %cst_3 = arith.constant 0.000000e+00 : f32
    %3 = vector.broadcast %cst_3 : f32 to vector<256x512xf32>
    %4 = arith.maximumf %2, %3 : vector<256x512xf32>
    %5 = arith.mulf %4, %4 : vector<256x512xf32>
    %cst_4 = arith.constant dense<0.000000e+00> : vector<256xf32>
    %6 = vector.multi_reduction <add>, %5, %cst_4 [1] : vector<256x512xf32> to vector<256xf32>
    %7 = vector.shape_cast %6 : vector<256xf32> to vector<256x1xf32>
    %8 = math.rsqrt %7 : vector<256x1xf32>
    %9 = arith.truncf %4 : vector<256x512xf32> to vector<256x512xbf16>
    %c0_5 = arith.constant 0 : index
    %c0_6 = arith.constant 0 : index
    %10 = vector.load %arg3[%c0_5, %c0_6] : memref<512x128xbf16, #tpu.memory_space<vmem>>, vector<512x128xbf16>
    %cst_7 = arith.constant dense<0.000000e+00> : vector<256x128xf32>
    %11 = tpu.matmul %9, %10, %cst_7 {dimension_numbers = #tpu.dot_dimension_numbers<[1], [0], [0], [1], [0, 0, 1, 1], [], []>} : vector<256x512xbf16>, vector<512x128xbf16>, vector<256x128xf32> -> vector<256x128xf32>
    %12 = vector.broadcast %8 : vector<256x1xf32> to vector<256x128xf32>
    %13 = arith.mulf %11, %12 : vector<256x128xf32>
    %14 = arith.truncf %13 : vector<256x128xf32> to vector<256x128xbf16>
    %c0_8 = arith.constant 0 : index
    %c0_9 = arith.constant 0 : index
    %15 = vector.load %arg4[%c0_8, %c0_9] : memref<256x128xbf16, #tpu.memory_space<vmem>>, vector<256x128xbf16>
    tpu.vector_store %arg4[%c0_8, %c0_9], %14 {strides = array<i32>} : memref<256x128xbf16, #tpu.memory_space<vmem>>, vector<256x128xbf16>,
    return
  }
  func.func @transform_0(%arg0: i32) -> (i32, i32) {
    %c0_i32 = arith.constant 0 : i32
    %c0_i32_0 = arith.constant 0 : i32
    return %arg0, %c0_i32 : i32, i32
  }
  func.func @transform_1(%arg0: i32) -> (i32, i32) {
    %c0_i32 = arith.constant 0 : i32
    %c0_i32_0 = arith.constant 0 : i32
    %c0_i32_1 = arith.constant 0 : i32
    return %c0_i32, %c0_i32_0 : i32, i32
  }
  func.func @transform_2(%arg0: i32) -> (i32, i32) {
    %c0_i32 = arith.constant 0 : i32
    %c0_i32_0 = arith.constant 0 : i32
    %c0_i32_1 = arith.constant 0 : i32
    return %c0_i32, %c0_i32_0 : i32, i32
  }
  func.func @transform_3(%arg0: i32) -> (i32, i32) {
    %c0_i32 = arith.constant 0 : i32
    %c0_i32_0 = arith.constant 0 : i32
    return %arg0, %c0_i32 : i32, i32
  }
}

</mosaic_0001>

<llo_original>
// kernel: tpu_custom_call.1
$region0: #{tpu_custom_call.1}
  #allocation0 [shape = 'u32[]', space=smem, size = 0x4, offset = 0x4, fixed_abs, tag = 'smem constant byte address 0x4 - core index']
  #allocation1 [shape = 'u32[72,128]{1,0:T(1,128)}', space=vmem, size = 0x9000, scoped, tag = 'internal scratch']
  %s0 = inlined_call_operand.vmem [shape: bf16[256,16], index: 0, kind: input, shape index: {}]
  %s1 = inlined_call_operand.vmem [shape: bf16[16,512], index: 1, kind: input, shape index: {}]
  %s2 = inlined_call_operand.hbm [shape: bf16[512,128], index: 2, kind: input, shape index: {}]
  %s3 = inlined_call_operand.hbm [shape: bf16[256,128], index: 3, kind: output, shape index: {}]
  %s4 = sld [smem:[#allocation0]]
  $region26: #{tpu_custom_call.1} parent=0
    _
  %s6 = ssub.s32 1, %s4
  %s7 = scalar_select 0, %s6, %s4
  $region1: #{tpu_custom_call.1} parent=0
    #allocation2 [shape = 'u8[131072]{0}', space=vmem, size = 0x20000, scoped, tag = 'input window, operand 2, single buffered']
    #allocation3 [shape = 's32[1]{0}', space=sflag, size = 0x4, scoped, tag = 'scoped memory for tpu_custom_call.1']
    #allocation4 [shape = 's32[1]{0}', space=sflag, size = 0x4, scoped, tag = 'scoped memory for tpu_custom_call.1']
    #allocation5 [shape = 'u8[65536]{0}', space=vmem, size = 0x10000, scoped, tag = 'output window, operand 0, single buffered']
    %8 = vsyncpa [#allocation3], 0
    %9 = vsyncpa [#allocation4], 0
    // Predicated region
    $region2: #{tpu_custom_call.1} parent=1 // pred_check
      _
    $region3: #{tpu_custom_call.1} parent=1 // pred_check_branch
      %11 = sbr.rel (0) target = $region5
    $region4: #{tpu_custom_call.1} parent=1 // pred_region
      _
    $region5: #{tpu_custom_call.1} parent=1 // pred_fallthru
      _
    // Predicated region
    $region6: #{tpu_custom_call.1} parent=1 // pred_check
      _
    $region7: #{tpu_custom_call.1} parent=1 // pred_check_branch
      %13 = sbr.rel (0) target = $region9
    $region8: #{tpu_custom_call.1} parent=1 // pred_region
      _
    $region9: #{tpu_custom_call.1} parent=1 // pred_fallthru
      _
    // Predicated region
    $region10: #{tpu_custom_call.1} parent=1 // pred_check
      _
    $region11: #{tpu_custom_call.1} parent=1 // pred_check_branch
      %15 = sbr.rel (0) target = $region13
    $region12: #{tpu_custom_call.1} parent=1 // pred_region
      %17 = vsyncadd [#allocation3], 0
      %s18 = sshll.u32 %s2, 4
      %s19 = int_to_ptr.hbm [resolvable:$true] %s18
      %s20 = sshll.u32 [#allocation2], 4
      %s21 = int_to_ptr.vmem [resolvable:$true] %s20
      %26 = dma.hbm_to_vmem [thread:$0]  %s19, 4096, %s21, [#allocation3], 64, 64, 4
    $region13: #{tpu_custom_call.1} parent=1 // pred_fallthru
      _
    // Predicated region
    $region14: #{tpu_custom_call.1} parent=1 // pred_check
      _
    $region15: #{tpu_custom_call.1} parent=1 // pred_check_branch
      %28 = sbr.rel (0) target = $region17
    $region16: #{tpu_custom_call.1} parent=1 // pred_region
      %30 = dma.done [#allocation3], 4096
    $region17: #{tpu_custom_call.1} parent=1 // pred_fallthru
      _
    %v32 = vld [vmem:[%s0] sm:$0xf]
    %v33 = vld [vmem:[%s0 + $0x4] sm:$0xf]
    %v34 = vld [vmem:[%s0 + $0x8] sm:$0xf]
    %v35 = vld [vmem:[%s0 + $0xc] sm:$0xf]
    %v36 = vld [vmem:[%s0 + $0x10] sm:$0xf]
    %v37 = vld [vmem:[%s0 + $0x14] sm:$0xf]
    %v38 = vld [vmem:[%s0 + $0x18] sm:$0xf]
    %v39 = vld [vmem:[%s0 + $0x1c] sm:$0xf]
    %v40 = vld [vmem:[%s0 + $0x20] sm:$0xf]
    %v41 = vld [vmem:[%s0 + $0x24] sm:$0xf]
    %v42 = vld [vmem:[%s0 + $0x28] sm:$0xf]
    %v43 = vld [vmem:[%s0 + $0x2c] sm:$0xf]
    %v44 = vld [vmem:[%s0 + $0x30] sm:$0xf]
    %v45 = vld [vmem:[%s0 + $0x34] sm:$0xf]
    %v46 = vld [vmem:[%s0 + $0x38] sm:$0xf]
    %v47 = vld [vmem:[%s0 + $0x3c] sm:$0xf]
    %v48 = vld [vmem:[%s0 + $0x40] sm:$0xf]
    %v49 = vld [vmem:[%s0 + $0x44] sm:$0xf]
    %v50 = vld [vmem:[%s0 + $0x48] sm:$0xf]
    %v51 = vld [vmem:[%s0 + $0x4c] sm:$0xf]
    %v52 = vld [vmem:[%s0 + $0x50] sm:$0xf]
    %v53 = vld [vmem:[%s0 + $0x54] sm:$0xf]
    %v54 = vld [vmem:[%s0 + $0x58] sm:$0xf]
    %v55 = vld [vmem:[%s0 + $0x5c] sm:$0xf]
    %v56 = vld [vmem:[%s0 + $0x60] sm:$0xf]
    %v57 = vld [vmem:[%s0 + $0x64] sm:$0xf]
    %v58 = vld [vmem:[%s0 + $0x68] sm:$0xf]
    %v59 = vld [vmem:[%s0 + $0x6c] sm:$0xf]
    %v60 = vld [vmem:[%s0 + $0x70] sm:$0xf]
    %v61 = vld [vmem:[%s0 + $0x74] sm:$0xf]
    %v62 = vld [vmem:[%s0 + $0x78] sm:$0xf]
    %v63 = vld [vmem:[%s0 + $0x7c] sm:$0xf]
    %v64 = vld [vmem:[%s1] sm:$0xff]
    %v65 = vld [vmem:[%s1 + $0x8] sm:$0xff]
    %v66 = vld [vmem:[%s1 + $0x10] sm:$0xff]
    %v67 = vld [vmem:[%s1 + $0x18] sm:$0xff]
    %v100 = vunpack.c.l.b16 %v32
    %v101 = vunpack.c.l.b16 %v33
    %v102 = vunpack.c.l.b16 %v34
    %v103 = vunpack.c.l.b16 %v35
    %v104 = vunpack.c.l.b16 %v36
    %v105 = vunpack.c.l.b16 %v37
    %v106 = vunpack.c.l.b16 %v38
    %v107 = vunpack.c.l.b16 %v39
    %v108 = vunpack.c.l.b16 %v40
    %v109 = vunpack.c.l.b16 %v41
    %v110 = vunpack.c.l.b16 %v42
    %v111 = vunpack.c.l.b16 %v43
    %v112 = vunpack.c.l.b16 %v44
    %v113 = vunpack.c.l.b16 %v45
    %v114 = vunpack.c.l.b16 %v46
    %v115 = vunpack.c.l.b16 %v47
    %v116 = vunpack.c.l.b16 %v48
    %v117 = vunpack.c.l.b16 %v49
    %v118 = vunpack.c.l.b16 %v50
    %v119 = vunpack.c.l.b16 %v51
    %v120 = vunpack.c.l.b16 %v52
    %v121 = vunpack.c.l.b16 %v53
    %v122 = vunpack.c.l.b16 %v54
    %v123 = vunpack.c.l.b16 %v55
    %v124 = vunpack.c.l.b16 %v56
    %v125 = vunpack.c.l.b16 %v57
    %v126 = vunpack.c.l.b16 %v58
    %v127 = vunpack.c.l.b16 %v59
    %v128 = vunpack.c.l.b16 %v60
    %v129 = vunpack.c.l.b16 %v61
    %v130 = vunpack.c.l.b16 %v62
    %v131 = vunpack.c.l.b16 %v63
    %v132 = vpack.c.b16 %v101, %v100
    %v133 = vpack.c.b16 %v103, %v102
    %v134 = vpack.c.b16 %v105, %v104
    %v135 = vpack.c.b16 %v107, %v106
    %v136 = vpack.c.b16 %v109, %v108
    %v137 = vpack.c.b16 %v111, %v110
    %v138 = vpack.c.b16 %v113, %v112
    %v139 = vpack.c.b16 %v115, %v114
    %v140 = vpack.c.b16 %v117, %v116
    %v141 = vpack.c.b16 %v119, %v118
    %v142 = vpack.c.b16 %v121, %v120
    %v143 = vpack.c.b16 %v123, %v122
    %v144 = vpack.c.b16 %v125, %v124
    %v145 = vpack.c.b16 %v127, %v126
    %v146 = vpack.c.b16 %v129, %v128
    %v147 = vpack.c.b16 %v131, %v130
    %v152 = vunpack.c.l.b16 %v64
    %v153 = vunpack.c.h.b16 %v64
    %v154 = vunpack.c.l.b16 %v65
    %v155 = vunpack.c.h.b16 %v65
    %v156 = vunpack.c.l.b16 %v66
    %v157 = vunpack.c.h.b16 %v66
    %v158 = vunpack.c.l.b16 %v67
    %v159 = vunpack.c.h.b16 %v67
    %v160 = vpack.c.b16 %v156, %v152
    %v161 = vpack.c.b16 %v157, %v153
    %v162 = vpack.c.b16 %v158, %v154
    %v163 = vpack.c.b16 %v159, %v155
    %vm168 = vcmask 130048
    %v170 = vsel %vm168, %v132, 0
    %v173 = vsel %vm168, %v133, 0
    %v176 = vsel %vm168, %v134, 0
    %v179 = vsel %vm168, %v135, 0
    %v182 = vsel %vm168, %v136, 0
    %v185 = vsel %vm168, %v137, 0
    %v188 = vsel %vm168, %v138, 0
    %v191 = vsel %vm168, %v139, 0
    %v194 = vsel %vm168, %v140, 0
    %v197 = vsel %vm168, %v141, 0
    %v200 = vsel %vm168, %v142, 0
    %v203 = vsel %vm168, %v143, 0
    %v206 = vsel %vm168, %v144, 0
    %v209 = vsel %vm168, %v145, 0
    %v212 = vsel %vm168, %v146, 0
    %v215 = vsel %vm168, %v147, 0
    %217 = vmatpush.bf16.msra.mxu0 0
    %218 = vmatpush.bf16.msra.mxu0 0
    %219 = vmatpush.bf16.msra.mxu0 0
    %220 = vmatpush.bf16.msra.mxu0 0
    %221 = vmatpush.bf16.msra.mxu0 0
    %222 = vmatpush.bf16.msra.mxu0 0
    %223 = vmatpush.bf16.msra.mxu0 0
    %224 = vmatpush.bf16.msra.mxu0 %v160
    %225 = vmatmul.bf16.gmra.mxu0 %v170
    %v226 = vpop.f32.mrf.mxu0
    %v227 = vadd.f32 0.0, %v226
    %v228 = vpop.f32.mrf.mxu0
    %v229 = vadd.f32 0.0, %v228
    %230 = vmatmul.bf16.gmra.mxu0 %v173
    %v231 = vpop.f32.mrf.mxu0
    %v232 = vadd.f32 0.0, %v231
    %v233 = vpop.f32.mrf.mxu0
    %v234 = vadd.f32 0.0, %v233
    %235 = vmatmul.bf16.gmra.mxu0 %v176
    %v236 = vpop.f32.mrf.mxu0
    %v237 = vadd.f32 0.0, %v236
    %v238 = vpop.f32.mrf.mxu0
    %v239 = vadd.f32 0.0, %v238
    %240 = vmatmul.bf16.gmra.mxu0 %v179
    %v241 = vpop.f32.mrf.mxu0
    %v242 = vadd.f32 0.0, %v241
    %v243 = vpop.f32.mrf.mxu0
    %v244 = vadd.f32 0.0, %v243
    %245 = vmatmul.bf16.gmra.mxu0 %v182
    %v246 = vpop.f32.mrf.mxu0
    %v247 = vadd.f32 0.0, %v246
    %v248 = vpop.f32.mrf.mxu0
    %v249 = vadd.f32 0.0, %v248
    %250 = vmatmul.bf16.gmra.mxu0 %v185
    %v251 = vpop.f32.mrf.mxu0
    %v252 = vadd.f32 0.0, %v251
    %v253 = vpop.f32.mrf.mxu0
    %v254 = vadd.f32 0.0, %v253
    %255 = vmatmul.bf16.gmra.mxu0 %v188
    %v256 = vpop.f32.mrf.mxu0
    %v257 = vadd.f32 0.0, %v256
    %v258 = vpop.f32.mrf.mxu0
    %v259 = vadd.f32 0.0, %v258
    %260 = vmatmul.bf16.gmra.mxu0 %v191
    %v261 = vpop.f32.mrf.mxu0
    %v262 = vadd.f32 0.0, %v261
    %v263 = vpop.f32.mrf.mxu0
    %v264 = vadd.f32 0.0, %v263
    %265 = vmatmul.bf16.gmra.mxu0 %v194
    %v266 = vpop.f32.mrf.mxu0
    %v267 = vadd.f32 0.0, %v266
    %v268 = vpop.f32.mrf.mxu0
    %v269 = vadd.f32 0.0, %v268
    %270 = vmatmul.bf16.gmra.mxu0 %v197
    %v271 = vpop.f32.mrf.mxu0
    %v272 = vadd.f32 0.0, %v271
    %v273 = vpop.f32.mrf.mxu0
    %v274 = vadd.f32 0.0, %v273
    %275 = vmatmul.bf16.gmra.mxu0 %v200
    %v276 = vpop.f32.mrf.mxu0
    %v277 = vadd.f32 0.0, %v276
    %v278 = vpop.f32.mrf.mxu0
    %v279 = vadd.f32 0.0, %v278
    %280 = vmatmul.bf16.gmra.mxu0 %v203
    %v281 = vpop.f32.mrf.mxu0
    %v282 = vadd.f32 0.0, %v281
    %v283 = vpop.f32.mrf.mxu0
    %v284 = vadd.f32 0.0, %v283
    %285 = vmatmul.bf16.gmra.mxu0 %v206
    %v286 = vpop.f32.mrf.mxu0
    %v287 = vadd.f32 0.0, %v286
    %v288 = vpop.f32.mrf.mxu0
    %v289 = vadd.f32 0.0, %v288
    %290 = vmatmul.bf16.gmra.mxu0 %v209
    %v291 = vpop.f32.mrf.mxu0
    %v292 = vadd.f32 0.0, %v291
    %v293 = vpop.f32.mrf.mxu0
    %v294 = vadd.f32 0.0, %v293
    %295 = vmatmul.bf16.gmra.mxu0 %v212
    %v296 = vpop.f32.mrf.mxu0
    %v297 = vadd.f32 0.0, %v296
    %v298 = vpop.f32.mrf.mxu0
    %v299 = vadd.f32 0.0, %v298
    %300 = vmatmul.bf16.gmra.mxu0 %v215
    %v301 = vpop.f32.mrf.mxu0
    %v302 = vadd.f32 0.0, %v301
    %v303 = vpop.f32.mrf.mxu0
    %v304 = vadd.f32 0.0, %v303
    %305 = vdwg.mxu0
    %306 = vmatpush.bf16.msra.mxu0 0
    %307 = vmatpush.bf16.msra.mxu0 0
    %308 = vmatpush.bf16.msra.mxu0 0
    %309 = vmatpush.bf16.msra.mxu0 0
    %310 = vmatpush.bf16.msra.mxu0 0
    %311 = vmatpush.bf16.msra.mxu0 0
    %312 = vmatpush.bf16.msra.mxu0 0
    %313 = vmatpush.bf16.msra.mxu0 %v161
    %314 = vmatmul.bf16.gmra.mxu0 %v170
    %v315 = vpop.f32.mrf.mxu0
    %v316 = vadd.f32 0.0, %v315
    %v317 = vpop.f32.mrf.mxu0
    %v318 = vadd.f32 0.0, %v317
    %319 = vmatmul.bf16.gmra.mxu0 %v173
    %v320 = vpop.f32.mrf.mxu0
    %v321 = vadd.f32 0.0, %v320
    %v322 = vpop.f32.mrf.mxu0
    %v323 = vadd.f32 0.0, %v322
    %324 = vmatmul.bf16.gmra.mxu0 %v176
    %v325 = vpop.f32.mrf.mxu0
    %v326 = vadd.f32 0.0, %v325
    %v327 = vpop.f32.mrf.mxu0
    %v328 = vadd.f32 0.0, %v327
    %329 = vmatmul.bf16.gmra.mxu0 %v179
    %v330 = vpop.f32.mrf.mxu0
    %v331 = vadd.f32 0.0, %v330
    %v332 = vpop.f32.mrf.mxu0
    %v333 = vadd.f32 0.0, %v332
    %334 = vmatmul.bf16.gmra.mxu0 %v182
    %v335 = vpop.f32.mrf.mxu0
    %v336 = vadd.f32 0.0, %v335
    %v337 = vpop.f32.mrf.mxu0
    %v338 = vadd.f32 0.0, %v337
    %339 = vmatmul.bf16.gmra.mxu0 %v185
    %v340 = vpop.f32.mrf.mxu0
    %v341 = vadd.f32 0.0, %v340
    %v342 = vpop.f32.mrf.mxu0
    %v343 = vadd.f32 0.0, %v342
    %344 = vmatmul.bf16.gmra.mxu0 %v188
    %v345 = vpop.f32.mrf.mxu0
    %v346 = vadd.f32 0.0, %v345
    %v347 = vpop.f32.mrf.mxu0
    %v348 = vadd.f32 0.0, %v347
    %349 = vmatmul.bf16.gmra.mxu0 %v191
    %v350 = vpop.f32.mrf.mxu0
    %v351 = vadd.f32 0.0, %v350
    %v352 = vpop.f32.mrf.mxu0
    %v353 = vadd.f32 0.0, %v352
    %354 = vmatmul.bf16.gmra.mxu0 %v194
    %v355 = vpop.f32.mrf.mxu0
    %v356 = vadd.f32 0.0, %v355
    %v357 = vpop.f32.mrf.mxu0
    %v358 = vadd.f32 0.0, %v357
    %359 = vmatmul.bf16.gmra.mxu0 %v197
    %v360 = vpop.f32.mrf.mxu0
    %v361 = vadd.f32 0.0, %v360
    %v362 = vpop.f32.mrf.mxu0
    %v363 = vadd.f32 0.0, %v362
    %364 = vmatmul.bf16.gmra.mxu0 %v200
    %v365 = vpop.f32.mrf.mxu0
    %v366 = vadd.f32 0.0, %v365
    %v367 = vpop.f32.mrf.mxu0
    %v368 = vadd.f32 0.0, %v367
    %369 = vmatmul.bf16.gmra.mxu0 %v203
    %v370 = vpop.f32.mrf.mxu0
    %v371 = vadd.f32 0.0, %v370
    %v372 = vpop.f32.mrf.mxu0
    %v373 = vadd.f32 0.0, %v372
    %374 = vmatmul.bf16.gmra.mxu0 %v206
    %v375 = vpop.f32.mrf.mxu0
    %v376 = vadd.f32 0.0, %v375
    %v377 = vpop.f32.mrf.mxu0
    %v378 = vadd.f32 0.0, %v377
    %379 = vmatmul.bf16.gmra.mxu0 %v209
    %v380 = vpop.f32.mrf.mxu0
    %v381 = vadd.f32 0.0, %v380
    %v382 = vpop.f32.mrf.mxu0
    %v383 = vadd.f32 0.0, %v382
    %384 = vmatmul.bf16.gmra.mxu0 %v212
    %v385 = vpop.f32.mrf.mxu0
    %v386 = vadd.f32 0.0, %v385
    %v387 = vpop.f32.mrf.mxu0
    %v388 = vadd.f32 0.0, %v387
    %389 = vmatmul.bf16.gmra.mxu0 %v215
    %v390 = vpop.f32.mrf.mxu0
    %v391 = vadd.f32 0.0, %v390
    %v392 = vpop.f32.mrf.mxu0
    %v393 = vadd.f32 0.0, %v392
    %394 = vdwg.mxu0
    %395 = vmatpush.bf16.msra.mxu0 0
    %396 = vmatpush.bf16.msra.mxu0 0
    %397 = vmatpush.bf16.msra.mxu0 0
    %398 = vmatpush.bf16.msra.mxu0 0
    %399 = vmatpush.bf16.msra.mxu0 0
    %400 = vmatpush.bf16.msra.mxu0 0
    %401 = vmatpush.bf16.msra.mxu0 0
    %402 = vmatpush.bf16.msra.mxu0 %v162
    %403 = vmatmul.bf16.gmra.mxu0 %v170
    %v404 = vpop.f32.mrf.mxu0
    %v405 = vadd.f32 0.0, %v404
    %v406 = vpop.f32.mrf.mxu0
    %v407 = vadd.f32 0.0, %v406
    %408 = vmatmul.bf16.gmra.mxu0 %v173
    %v409 = vpop.f32.mrf.mxu0
    %v410 = vadd.f32 0.0, %v409
    %v411 = vpop.f32.mrf.mxu0
    %v412 = vadd.f32 0.0, %v411
    %413 = vmatmul.bf16.gmra.mxu0 %v176
    %v414 = vpop.f32.mrf.mxu0
    %v415 = vadd.f32 0.0, %v414
    %v416 = vpop.f32.mrf.mxu0
    %v417 = vadd.f32 0.0, %v416
    %418 = vmatmul.bf16.gmra.mxu0 %v179
    %v419 = vpop.f32.mrf.mxu0
    %v420 = vadd.f32 0.0, %v419
    %v421 = vpop.f32.mrf.mxu0
    %v422 = vadd.f32 0.0, %v421
    %423 = vmatmul.bf16.gmra.mxu0 %v182
    %v424 = vpop.f32.mrf.mxu0
    %v425 = vadd.f32 0.0, %v424
    %v426 = vpop.f32.mrf.mxu0
    %v427 = vadd.f32 0.0, %v426
    %428 = vmatmul.bf16.gmra.mxu0 %v185
    %v429 = vpop.f32.mrf.mxu0
    %v430 = vadd.f32 0.0, %v429
    %v431 = vpop.f32.mrf.mxu0
    %v432 = vadd.f32 0.0, %v431
    %433 = vmatmul.bf16.gmra.mxu0 %v188
    %v434 = vpop.f32.mrf.mxu0
    %v435 = vadd.f32 0.0, %v434
    %v436 = vpop.f32.mrf.mxu0
    %v437 = vadd.f32 0.0, %v436
    %438 = vmatmul.bf16.gmra.mxu0 %v191
    %v439 = vpop.f32.mrf.mxu0
    %v440 = vadd.f32 0.0, %v439
    %v441 = vpop.f32.mrf.mxu0
    %v442 = vadd.f32 0.0, %v441
    %443 = vmatmul.bf16.gmra.mxu0 %v194
    %v444 = vpop.f32.mrf.mxu0
    %v445 = vadd.f32 0.0, %v444
    %v446 = vpop.f32.mrf.mxu0
    %v447 = vadd.f32 0.0, %v446
    %448 = vmatmul.bf16.gmra.mxu0 %v197
    %v449 = vpop.f32.mrf.mxu0
    %v450 = vadd.f32 0.0, %v449
    %v451 = vpop.f32.mrf.mxu0
    %v452 = vadd.f32 0.0, %v451
    %453 = vmatmul.bf16.gmra.mxu0 %v200
    %v454 = vpop.f32.mrf.mxu0
    %v455 = vadd.f32 0.0, %v454
    %v456 = vpop.f32.mrf.mxu0
    %v457 = vadd.f32 0.0, %v456
    %458 = vmatmul.bf16.gmra.mxu0 %v203
    %v459 = vpop.f32.mrf.mxu0
    %v460 = vadd.f32 0.0, %v459
    %v461 = vpop.f32.mrf.mxu0
    %v462 = vadd.f32 0.0, %v461
    %463 = vmatmul.bf16.gmra.mxu0 %v206
    %v464 = vpop.f32.mrf.mxu0
    %v465 = vadd.f32 0.0, %v464
    %v466 = vpop.f32.mrf.mxu0
    %v467 = vadd.f32 0.0, %v466
    %468 = vmatmul.bf16.gmra.mxu0 %v209
    %v469 = vpop.f32.mrf.mxu0
    %v470 = vadd.f32 0.0, %v469
    %v471 = vpop.f32.mrf.mxu0
    %v472 = vadd.f32 0.0, %v471
    %473 = vmatmul.bf16.gmra.mxu0 %v212
    %v474 = vpop.f32.mrf.mxu0
    %v475 = vadd.f32 0.0, %v474
    %v476 = vpop.f32.mrf.mxu0
    %v477 = vadd.f32 0.0, %v476
    %478 = vmatmul.bf16.gmra.mxu0 %v215
    %v479 = vpop.f32.mrf.mxu0
    %v480 = vadd.f32 0.0, %v479
    %v481 = vpop.f32.mrf.mxu0
    %v482 = vadd.f32 0.0, %v481
    %483 = vdwg.mxu0
    %484 = vmatpush.bf16.msra.mxu0 0
    %485 = vmatpush.bf16.msra.mxu0 0
    %486 = vmatpush.bf16.msra.mxu0 0
    %487 = vmatpush.bf16.msra.mxu0 0
    %488 = vmatpush.bf16.msra.mxu0 0
    %489 = vmatpush.bf16.msra.mxu0 0
    %490 = vmatpush.bf16.msra.mxu0 0
    %491 = vmatpush.bf16.msra.mxu0 %v163
    %492 = vmatmul.bf16.gmra.mxu0 %v170
    %v493 = vpop.f32.mrf.mxu0
    %v494 = vadd.f32 0.0, %v493
    %v495 = vpop.f32.mrf.mxu0
    %v496 = vadd.f32 0.0, %v495
    %497 = vmatmul.bf16.gmra.mxu0 %v173
    %v498 = vpop.f32.mrf.mxu0
    %v499 = vadd.f32 0.0, %v498
    %v500 = vpop.f32.mrf.mxu0
    %v501 = vadd.f32 0.0, %v500
    %502 = vmatmul.bf16.gmra.mxu0 %v176
    %v503 = vpop.f32.mrf.mxu0
    %v504 = vadd.f32 0.0, %v503
    %v505 = vpop.f32.mrf.mxu0
    %v506 = vadd.f32 0.0, %v505
    %507 = vmatmul.bf16.gmra.mxu0 %v179
    %v508 = vpop.f32.mrf.mxu0
    %v509 = vadd.f32 0.0, %v508
    %v510 = vpop.f32.mrf.mxu0
    %v511 = vadd.f32 0.0, %v510
    %512 = vmatmul.bf16.gmra.mxu0 %v182
    %v513 = vpop.f32.mrf.mxu0
    %v514 = vadd.f32 0.0, %v513
    %v515 = vpop.f32.mrf.mxu0
    %v516 = vadd.f32 0.0, %v515
    %517 = vmatmul.bf16.gmra.mxu0 %v185
    %v518 = vpop.f32.mrf.mxu0
    %v519 = vadd.f32 0.0, %v518
    %v520 = vpop.f32.mrf.mxu0
    %v521 = vadd.f32 0.0, %v520
    %522 = vmatmul.bf16.gmra.mxu0 %v188
    %v523 = vpop.f32.mrf.mxu0
    %v524 = vadd.f32 0.0, %v523
    %v525 = vpop.f32.mrf.mxu0
    %v526 = vadd.f32 0.0, %v525
    %527 = vmatmul.bf16.gmra.mxu0 %v191
    %v528 = vpop.f32.mrf.mxu0
    %v529 = vadd.f32 0.0, %v528
    %v530 = vpop.f32.mrf.mxu0
    %v531 = vadd.f32 0.0, %v530
    %532 = vmatmul.bf16.gmra.mxu0 %v194
    %v533 = vpop.f32.mrf.mxu0
    %v534 = vadd.f32 0.0, %v533
    %v535 = vpop.f32.mrf.mxu0
    %v536 = vadd.f32 0.0, %v535
    %537 = vmatmul.bf16.gmra.mxu0 %v197
    %v538 = vpop.f32.mrf.mxu0
    %v539 = vadd.f32 0.0, %v538
    %v540 = vpop.f32.mrf.mxu0
    %v541 = vadd.f32 0.0, %v540
    %542 = vmatmul.bf16.gmra.mxu0 %v200
    %v543 = vpop.f32.mrf.mxu0
    %v544 = vadd.f32 0.0, %v543
    %v545 = vpop.f32.mrf.mxu0
    %v546 = vadd.f32 0.0, %v545
    %547 = vmatmul.bf16.gmra.mxu0 %v203
    %v548 = vpop.f32.mrf.mxu0
    %v549 = vadd.f32 0.0, %v548
    %v550 = vpop.f32.mrf.mxu0
    %v551 = vadd.f32 0.0, %v550
    %552 = vmatmul.bf16.gmra.mxu0 %v206
    %v553 = vpop.f32.mrf.mxu0
    %v554 = vadd.f32 0.0, %v553
    %v555 = vpop.f32.mrf.mxu0
    %v556 = vadd.f32 0.0, %v555
    %557 = vmatmul.bf16.gmra.mxu0 %v209
    %v558 = vpop.f32.mrf.mxu0
    %v559 = vadd.f32 0.0, %v558
    %v560 = vpop.f32.mrf.mxu0
    %v561 = vadd.f32 0.0, %v560
    %562 = vmatmul.bf16.gmra.mxu0 %v212
    %v563 = vpop.f32.mrf.mxu0
    %v564 = vadd.f32 0.0, %v563
    %v565 = vpop.f32.mrf.mxu0
    %v566 = vadd.f32 0.0, %v565
    %567 = vmatmul.bf16.gmra.mxu0 %v215
    %v568 = vpop.f32.mrf.mxu0
    %v569 = vadd.f32 0.0, %v568
    %v570 = vpop.f32.mrf.mxu0
    %v571 = vadd.f32 0.0, %v570
    %572 = vdwg.mxu0
    %v573 = vmax.f32 %v227, 0.0
    %v574 = vmax.f32 %v316, 0.0
    %v575 = vmax.f32 %v405, 0.0
    %v576 = vmax.f32 %v494, 0.0
    %v577 = vmax.f32 %v229, 0.0
    %v578 = vmax.f32 %v318, 0.0
    %v579 = vmax.f32 %v407, 0.0
    %v580 = vmax.f32 %v496, 0.0
    %v581 = vmax.f32 %v232, 0.0
    %v582 = vmax.f32 %v321, 0.0
    %v583 = vmax.f32 %v410, 0.0
    %v584 = vmax.f32 %v499, 0.0
    %v585 = vmax.f32 %v234, 0.0
    %v586 = vmax.f32 %v323, 0.0
    %v587 = vmax.f32 %v412, 0.0
    %v588 = vmax.f32 %v501, 0.0
    %v589 = vmax.f32 %v237, 0.0
    %v590 = vmax.f32 %v326, 0.0
    %v591 = vmax.f32 %v415, 0.0
    %v592 = vmax.f32 %v504, 0.0
    %v593 = vmax.f32 %v239, 0.0
    %v594 = vmax.f32 %v328, 0.0
    %v595 = vmax.f32 %v417, 0.0
    %v596 = vmax.f32 %v506, 0.0
    %v597 = vmax.f32 %v242, 0.0
    %v598 = vmax.f32 %v331, 0.0
    %v599 = vmax.f32 %v420, 0.0
    %v600 = vmax.f32 %v509, 0.0
    %v601 = vmax.f32 %v244, 0.0
    %v602 = vmax.f32 %v333, 0.0
    %v603 = vmax.f32 %v422, 0.0
    %v604 = vmax.f32 %v511, 0.0
    %v605 = vmax.f32 %v247, 0.0
    %v606 = vmax.f32 %v336, 0.0
    %v607 = vmax.f32 %v425, 0.0
    %v608 = vmax.f32 %v514, 0.0
    %v609 = vmax.f32 %v249, 0.0
    %v610 = vmax.f32 %v338, 0.0
    %v611 = vmax.f32 %v427, 0.0
    %v612 = vmax.f32 %v516, 0.0
    %v613 = vmax.f32 %v252, 0.0
    %v614 = vmax.f32 %v341, 0.0
    %v615 = vmax.f32 %v430, 0.0
    %v616 = vmax.f32 %v519, 0.0
    %v617 = vmax.f32 %v254, 0.0
    %v618 = vmax.f32 %v343, 0.0
    %v619 = vmax.f32 %v432, 0.0
    %v620 = vmax.f32 %v521, 0.0
    %v621 = vmax.f32 %v257, 0.0
    %v622 = vmax.f32 %v346, 0.0
    %v623 = vmax.f32 %v435, 0.0
    %v624 = vmax.f32 %v524, 0.0
    %v625 = vmax.f32 %v259, 0.0
    %v626 = vmax.f32 %v348, 0.0
    %v627 = vmax.f32 %v437, 0.0
    %v628 = vmax.f32 %v526, 0.0
    %v629 = vmax.f32 %v262, 0.0
    %v630 = vmax.f32 %v351, 0.0
    %v631 = vmax.f32 %v440, 0.0
    %v632 = vmax.f32 %v529, 0.0
    %v633 = vmax.f32 %v264, 0.0
    %v634 = vmax.f32 %v353, 0.0
    %v635 = vmax.f32 %v442, 0.0
    %v636 = vmax.f32 %v531, 0.0
    %v637 = vmax.f32 %v267, 0.0
    %v638 = vmax.f32 %v356, 0.0
    %v639 = vmax.f32 %v445, 0.0
    %v640 = vmax.f32 %v534, 0.0
    %v641 = vmax.f32 %v269, 0.0
    %v642 = vmax.f32 %v358, 0.0
    %v643 = vmax.f32 %v447, 0.0
    %v644 = vmax.f32 %v536, 0.0
    %v645 = vmax.f32 %v272, 0.0
    %v646 = vmax.f32 %v361, 0.0
    %v647 = vmax.f32 %v450, 0.0
    %v648 = vmax.f32 %v539, 0.0
    %v649 = vmax.f32 %v274, 0.0
    %v650 = vmax.f32 %v363, 0.0
    %v651 = vmax.f32 %v452, 0.0
    %v652 = vmax.f32 %v541, 0.0
    %v653 = vmax.f32 %v277, 0.0
    %v654 = vmax.f32 %v366, 0.0
    %v655 = vmax.f32 %v455, 0.0
    %v656 = vmax.f32 %v544, 0.0
    %v657 = vmax.f32 %v279, 0.0
    %v658 = vmax.f32 %v368, 0.0
    %v659 = vmax.f32 %v457, 0.0
    %v660 = vmax.f32 %v546, 0.0
    %v661 = vmax.f32 %v282, 0.0
    %v662 = vmax.f32 %v371, 0.0
    %v663 = vmax.f32 %v460, 0.0
    %v664 = vmax.f32 %v549, 0.0
    %v665 = vmax.f32 %v284, 0.0
    %v666 = vmax.f32 %v373, 0.0
    %v667 = vmax.f32 %v462, 0.0
    %v668 = vmax.f32 %v551, 0.0
    %v669 = vmax.f32 %v287, 0.0
    %v670 = vmax.f32 %v376, 0.0
    %v671 = vmax.f32 %v465, 0.0
    %v672 = vmax.f32 %v554, 0.0
    %v673 = vmax.f32 %v289, 0.0
    %v674 = vmax.f32 %v378, 0.0
    %v675 = vmax.f32 %v467, 0.0
    %v676 = vmax.f32 %v556, 0.0
    %v677 = vmax.f32 %v292, 0.0
    %v678 = vmax.f32 %v381, 0.0
    %v679 = vmax.f32 %v470, 0.0
    %v680 = vmax.f32 %v559, 0.0
    %v681 = vmax.f32 %v294, 0.0
    %v682 = vmax.f32 %v383, 0.0
    %v683 = vmax.f32 %v472, 0.0
    %v684 = vmax.f32 %v561, 0.0
    %v685 = vmax.f32 %v297, 0.0
    %v686 = vmax.f32 %v386, 0.0
    %v687 = vmax.f32 %v475, 0.0
    %v688 = vmax.f32 %v564, 0.0
    %v689 = vmax.f32 %v299, 0.0
    %v690 = vmax.f32 %v388, 0.0
    %v691 = vmax.f32 %v477, 0.0
    %v692 = vmax.f32 %v566, 0.0
    %v693 = vmax.f32 %v302, 0.0
    %v694 = vmax.f32 %v391, 0.0
    %v695 = vmax.f32 %v480, 0.0
    %v696 = vmax.f32 %v569, 0.0
    %v697 = vmax.f32 %v304, 0.0
    %v698 = vmax.f32 %v393, 0.0
    %v699 = vmax.f32 %v482, 0.0
    %v700 = vmax.f32 %v571, 0.0
    %v701 = vmul.f32 %v573, %v573
    %v702 = vmul.f32 %v574, %v574
    %v703 = vmul.f32 %v575, %v575
    %v704 = vmul.f32 %v576, %v576
    %v705 = vmul.f32 %v577, %v577
    %v706 = vmul.f32 %v578, %v578
    %v707 = vmul.f32 %v579, %v579
    %v708 = vmul.f32 %v580, %v580
    %v709 = vmul.f32 %v581, %v581
    %v710 = vmul.f32 %v582, %v582
    %v711 = vmul.f32 %v583, %v583
    %v712 = vmul.f32 %v584, %v584
    %v713 = vmul.f32 %v585, %v585
    %v714 = vmul.f32 %v586, %v586
    %v715 = vmul.f32 %v587, %v587
    %v716 = vmul.f32 %v588, %v588
    %v717 = vmul.f32 %v589, %v589
    %v718 = vmul.f32 %v590, %v590
    %v719 = vmul.f32 %v591, %v591
    %v720 = vmul.f32 %v592, %v592
    %v721 = vmul.f32 %v593, %v593
    %v722 = vmul.f32 %v594, %v594
    %v723 = vmul.f32 %v595, %v595
    %v724 = vmul.f32 %v596, %v596
    %v725 = vmul.f32 %v597, %v597
    %v726 = vmul.f32 %v598, %v598
    %v727 = vmul.f32 %v599, %v599
    %v728 = vmul.f32 %v600, %v600
    %v729 = vmul.f32 %v601, %v601
    %v730 = vmul.f32 %v602, %v602
    %v731 = vmul.f32 %v603, %v603
    %v732 = vmul.f32 %v604, %v604
    %v733 = vmul.f32 %v605, %v605
    %v734 = vmul.f32 %v606, %v606
    %v735 = vmul.f32 %v607, %v607
    %v736 = vmul.f32 %v608, %v608
    %v737 = vmul.f32 %v609, %v609
    %v738 = vmul.f32 %v610, %v610
    %v739 = vmul.f32 %v611, %v611
    %v740 = vmul.f32 %v612, %v612
    %v741 = vmul.f32 %v613, %v613
    %v742 = vmul.f32 %v614, %v614
    %v743 = vmul.f32 %v615, %v615
    %v744 = vmul.f32 %v616, %v616
    %v745 = vmul.f32 %v617, %v617
    %v746 = vmul.f32 %v618, %v618
    %v747 = vmul.f32 %v619, %v619
    %v748 = vmul.f32 %v620, %v620
    %v749 = vmul.f32 %v621, %v621
    %v750 = vmul.f32 %v622, %v622
    %v751 = vmul.f32 %v623, %v623
    %v752 = vmul.f32 %v624, %v624
    %v753 = vmul.f32 %v625, %v625
    %v754 = vmul.f32 %v626, %v626
    %v755 = vmul.f32 %v627, %v627
    %v756 = vmul.f32 %v628, %v628
    %v757 = vmul.f32 %v629, %v629
    %v758 = vmul.f32 %v630, %v630
    %v759 = vmul.f32 %v631, %v631
    %v760 = vmul.f32 %v632, %v632
    %v761 = vmul.f32 %v633, %v633
    %v762 = vmul.f32 %v634, %v634
    %v763 = vmul.f32 %v635, %v635
    %v764 = vmul.f32 %v636, %v636
    %v765 = vmul.f32 %v637, %v637
    %v766 = vmul.f32 %v638, %v638
    %v767 = vmul.f32 %v639, %v639
    %v768 = vmul.f32 %v640, %v640
    %v769 = vmul.f32 %v641, %v641
    %v770 = vmul.f32 %v642, %v642
    %v771 = vmul.f32 %v643, %v643
    %v772 = vmul.f32 %v644, %v644
    %v773 = vmul.f32 %v645, %v645
    %v774 = vmul.f32 %v646, %v646
    %v775 = vmul.f32 %v647, %v647
    %v776 = vmul.f32 %v648, %v648
    %v777 = vmul.f32 %v649, %v649
    %v778 = vmul.f32 %v650, %v650
    %v779 = vmul.f32 %v651, %v651
    %v780 = vmul.f32 %v652, %v652
    %v781 = vmul.f32 %v653, %v653
    %v782 = vmul.f32 %v654, %v654
    %v783 = vmul.f32 %v655, %v655
    %v784 = vmul.f32 %v656, %v656
    %v785 = vmul.f32 %v657, %v657
    %v786 = vmul.f32 %v658, %v658
    %v787 = vmul.f32 %v659, %v659
    %v788 = vmul.f32 %v660, %v660
    %v789 = vmul.f32 %v661, %v661
    %v790 = vmul.f32 %v662, %v662
    %v791 = vmul.f32 %v663, %v663
    %v792 = vmul.f32 %v664, %v664
    %v793 = vmul.f32 %v665, %v665
    %v794 = vmul.f32 %v666, %v666
    %v795 = vmul.f32 %v667, %v667
    %v796 = vmul.f32 %v668, %v668
    %v797 = vmul.f32 %v669, %v669
    %v798 = vmul.f32 %v670, %v670
    %v799 = vmul.f32 %v671, %v671
    %v800 = vmul.f32 %v672, %v672
    %v801 = vmul.f32 %v673, %v673
    %v802 = vmul.f32 %v674, %v674
    %v803 = vmul.f32 %v675, %v675
    %v804 = vmul.f32 %v676, %v676
    %v805 = vmul.f32 %v677, %v677
    %v806 = vmul.f32 %v678, %v678
    %v807 = vmul.f32 %v679, %v679
    %v808 = vmul.f32 %v680, %v680
    %v809 = vmul.f32 %v681, %v681
    %v810 = vmul.f32 %v682, %v682
    %v811 = vmul.f32 %v683, %v683
    %v812 = vmul.f32 %v684, %v684
    %v813 = vmul.f32 %v685, %v685
    %v814 = vmul.f32 %v686, %v686
    %v815 = vmul.f32 %v687, %v687
    %v816 = vmul.f32 %v688, %v688
    %v817 = vmul.f32 %v689, %v689
    %v818 = vmul.f32 %v690, %v690
    %v819 = vmul.f32 %v691, %v691
    %v820 = vmul.f32 %v692, %v692
    %v821 = vmul.f32 %v693, %v693
    %v822 = vmul.f32 %v694, %v694
    %v823 = vmul.f32 %v695, %v695
    %v824 = vmul.f32 %v696, %v696
    %v825 = vmul.f32 %v697, %v697
    %v826 = vmul.f32 %v698, %v698
    %v827 = vmul.f32 %v699, %v699
    %v828 = vmul.f32 %v700, %v700
    %v829 = vadd.f32 %v701, %v702
    %v830 = vadd.f32 %v829, %v703
    %v831 = vadd.f32 %v830, %v704
    %832 = vadd.xlane.f32.xlu0 %v831
    %v833 = vpop.xlane.xlu0 %832
    %v834 = vadd.f32 %v705, %v706
    %v835 = vadd.f32 %v834, %v707
    %v836 = vadd.f32 %v835, %v708
    %837 = vadd.xlane.f32.xlu0 %v836
    %v838 = vpop.xlane.xlu0 %837
    %v839 = vadd.f32 %v709, %v710
    %v840 = vadd.f32 %v839, %v711
    %v841 = vadd.f32 %v840, %v712
    %842 = vadd.xlane.f32.xlu0 %v841
    %v843 = vpop.xlane.xlu0 %842
    %v844 = vadd.f32 %v713, %v714
    %v845 = vadd.f32 %v844, %v715
    %v846 = vadd.f32 %v845, %v716
    %847 = vadd.xlane.f32.xlu0 %v846
    %v848 = vpop.xlane.xlu0 %847
    %v849 = vadd.f32 %v717, %v718
    %v850 = vadd.f32 %v849, %v719
    %v851 = vadd.f32 %v850, %v720
    %852 = vadd.xlane.f32.xlu0 %v851
    %v853 = vpop.xlane.xlu0 %852
    %v854 = vadd.f32 %v721, %v722
    %v855 = vadd.f32 %v854, %v723
    %v856 = vadd.f32 %v855, %v724
    %857 = vadd.xlane.f32.xlu0 %v856
    %v858 = vpop.xlane.xlu0 %857
    %v859 = vadd.f32 %v725, %v726
    %v860 = vadd.f32 %v859, %v727
    %v861 = vadd.f32 %v860, %v728
    %862 = vadd.xlane.f32.xlu0 %v861
    %v863 = vpop.xlane.xlu0 %862
    %v864 = vadd.f32 %v729, %v730
    %v865 = vadd.f32 %v864, %v731
    %v866 = vadd.f32 %v865, %v732
    %867 = vadd.xlane.f32.xlu0 %v866
    %v868 = vpop.xlane.xlu0 %867
    %v869 = vadd.f32 %v733, %v734
    %v870 = vadd.f32 %v869, %v735
    %v871 = vadd.f32 %v870, %v736
    %872 = vadd.xlane.f32.xlu0 %v871
    %v873 = vpop.xlane.xlu0 %872
    %v874 = vadd.f32 %v737, %v738
    %v875 = vadd.f32 %v874, %v739
    %v876 = vadd.f32 %v875, %v740
    %877 = vadd.xlane.f32.xlu0 %v876
    %v878 = vpop.xlane.xlu0 %877
    %v879 = vadd.f32 %v741, %v742
    %v880 = vadd.f32 %v879, %v743
    %v881 = vadd.f32 %v880, %v744
    %882 = vadd.xlane.f32.xlu0 %v881
    %v883 = vpop.xlane.xlu0 %882
    %v884 = vadd.f32 %v745, %v746
    %v885 = vadd.f32 %v884, %v747
    %v886 = vadd.f32 %v885, %v748
    %887 = vadd.xlane.f32.xlu0 %v886
    %v888 = vpop.xlane.xlu0 %887
    %v889 = vadd.f32 %v749, %v750
    %v890 = vadd.f32 %v889, %v751
    %v891 = vadd.f32 %v890, %v752
    %892 = vadd.xlane.f32.xlu0 %v891
    %v893 = vpop.xlane.xlu0 %892
    %v894 = vadd.f32 %v753, %v754
    %v895 = vadd.f32 %v894, %v755
    %v896 = vadd.f32 %v895, %v756
    %897 = vadd.xlane.f32.xlu0 %v896
    %v898 = vpop.xlane.xlu0 %897
    %v899 = vadd.f32 %v757, %v758
    %v900 = vadd.f32 %v899, %v759
    %v901 = vadd.f32 %v900, %v760
    %902 = vadd.xlane.f32.xlu0 %v901
    %v903 = vpop.xlane.xlu0 %902
    %v904 = vadd.f32 %v761, %v762
    %v905 = vadd.f32 %v904, %v763
    %v906 = vadd.f32 %v905, %v764
    %907 = vadd.xlane.f32.xlu0 %v906
    %v908 = vpop.xlane.xlu0 %907
    %v909 = vadd.f32 %v765, %v766
    %v910 = vadd.f32 %v909, %v767
    %v911 = vadd.f32 %v910, %v768
    %912 = vadd.xlane.f32.xlu0 %v911
    %v913 = vpop.xlane.xlu0 %912
    %v914 = vadd.f32 %v769, %v770
    %v915 = vadd.f32 %v914, %v771
    %v916 = vadd.f32 %v915, %v772
    %917 = vadd.xlane.f32.xlu0 %v916
    %v918 = vpop.xlane.xlu0 %917
    %v919 = vadd.f32 %v773, %v774
    %v920 = vadd.f32 %v919, %v775
    %v921 = vadd.f32 %v920, %v776
    %922 = vadd.xlane.f32.xlu0 %v921
    %v923 = vpop.xlane.xlu0 %922
    %v924 = vadd.f32 %v777, %v778
    %v925 = vadd.f32 %v924, %v779
    %v926 = vadd.f32 %v925, %v780
    %927 = vadd.xlane.f32.xlu0 %v926
    %v928 = vpop.xlane.xlu0 %927
    %v929 = vadd.f32 %v781, %v782
    %v930 = vadd.f32 %v929, %v783
    %v931 = vadd.f32 %v930, %v784
    %932 = vadd.xlane.f32.xlu0 %v931
    %v933 = vpop.xlane.xlu0 %932
    %v934 = vadd.f32 %v785, %v786
    %v935 = vadd.f32 %v934, %v787
    %v936 = vadd.f32 %v935, %v788
    %937 = vadd.xlane.f32.xlu0 %v936
    %v938 = vpop.xlane.xlu0 %937
    %v939 = vadd.f32 %v789, %v790
    %v940 = vadd.f32 %v939, %v791
    %v941 = vadd.f32 %v940, %v792
    %942 = vadd.xlane.f32.xlu0 %v941
    %v943 = vpop.xlane.xlu0 %942
    %v944 = vadd.f32 %v793, %v794
    %v945 = vadd.f32 %v944, %v795
    %v946 = vadd.f32 %v945, %v796
    %947 = vadd.xlane.f32.xlu0 %v946
    %v948 = vpop.xlane.xlu0 %947
    %v949 = vadd.f32 %v797, %v798
    %v950 = vadd.f32 %v949, %v799
    %v951 = vadd.f32 %v950, %v800
    %952 = vadd.xlane.f32.xlu0 %v951
    %v953 = vpop.xlane.xlu0 %952
    %v954 = vadd.f32 %v801, %v802
    %v955 = vadd.f32 %v954, %v803
    %v956 = vadd.f32 %v955, %v804
    %957 = vadd.xlane.f32.xlu0 %v956
    %v958 = vpop.xlane.xlu0 %957
    %v959 = vadd.f32 %v805, %v806
    %v960 = vadd.f32 %v959, %v807
    %v961 = vadd.f32 %v960, %v808
    %962 = vadd.xlane.f32.xlu0 %v961
    %v963 = vpop.xlane.xlu0 %962
    %v964 = vadd.f32 %v809, %v810
    %v965 = vadd.f32 %v964, %v811
    %v966 = vadd.f32 %v965, %v812
    %967 = vadd.xlane.f32.xlu0 %v966
    %v968 = vpop.xlane.xlu0 %967
    %v969 = vadd.f32 %v813, %v814
    %v970 = vadd.f32 %v969, %v815
    %v971 = vadd.f32 %v970, %v816
    %972 = vadd.xlane.f32.xlu0 %v971
    %v973 = vpop.xlane.xlu0 %972
    %v974 = vadd.f32 %v817, %v818
    %v975 = vadd.f32 %v974, %v819
    %v976 = vadd.f32 %v975, %v820
    %977 = vadd.xlane.f32.xlu0 %v976
    %v978 = vpop.xlane.xlu0 %977
    %v979 = vadd.f32 %v821, %v822
    %v980 = vadd.f32 %v979, %v823
    %v981 = vadd.f32 %v980, %v824
    %982 = vadd.xlane.f32.xlu0 %v981
    %v983 = vpop.xlane.xlu0 %982
    %v984 = vadd.f32 %v825, %v826
    %v985 = vadd.f32 %v984, %v827
    %v986 = vadd.f32 %v985, %v828
    %987 = vadd.xlane.f32.xlu0 %v986
    %v988 = vpop.xlane.xlu0 %987
    %v989 = vrsqrt.pop %v833
    %v990 = vmul.f32 %v989, %v833
    %v991 = vmul.f32 %v990, %v989
    %v992 = vmul.f32 0.5, %v991
    %v993 = vsub.f32 1.5, %v992
    %v994 = vmul.f32 %v989, %v993
    %vm995 = vweird.f32 %v833
    %vm996 = vweird.f32 %v989
    %vm997 = vmor %vm995, %vm996
    %v998 = vsel %vm997, %v989, %v994
    %v999 = vrsqrt.pop %v838
    %v1000 = vmul.f32 %v999, %v838
    %v1001 = vmul.f32 %v1000, %v999
    %v1002 = vmul.f32 0.5, %v1001
    %v1003 = vsub.f32 1.5, %v1002
    %v1004 = vmul.f32 %v999, %v1003
    %vm1005 = vweird.f32 %v838
    %vm1006 = vweird.f32 %v999
    %vm1007 = vmor %vm1005, %vm1006
    %v1008 = vsel %vm1007, %v999, %v1004
    %v1009 = vrsqrt.pop %v843
    %v1010 = vmul.f32 %v1009, %v843
    %v1011 = vmul.f32 %v1010, %v1009
    %v1012 = vmul.f32 0.5, %v1011
    %v1013 = vsub.f32 1.5, %v1012
    %v1014 = vmul.f32 %v1009, %v1013
    %vm1015 = vweird.f32 %v843
    %vm1016 = vweird.f32 %v1009
    %vm1017 = vmor %vm1015, %vm1016
    %v1018 = vsel %vm1017, %v1009, %v1014
    %v1019 = vrsqrt.pop %v848
    %v1020 = vmul.f32 %v1019, %v848
    %v1021 = vmul.f32 %v1020, %v1019
    %v1022 = vmul.f32 0.5, %v1021
    %v1023 = vsub.f32 1.5, %v1022
    %v1024 = vmul.f32 %v1019, %v1023
    %vm1025 = vweird.f32 %v848
    %vm1026 = vweird.f32 %v1019
    %vm1027 = vmor %vm1025, %vm1026
    %v1028 = vsel %vm1027, %v1019, %v1024
    %v1029 = vrsqrt.pop %v853
    %v1030 = vmul.f32 %v1029, %v853
    %v1031 = vmul.f32 %v1030, %v1029
    %v1032 = vmul.f32 0.5, %v1031
    %v1033 = vsub.f32 1.5, %v1032
    %v1034 = vmul.f32 %v1029, %v1033
    %vm1035 = vweird.f32 %v853
    %vm1036 = vweird.f32 %v1029
    %vm1037 = vmor %vm1035, %vm1036
    %v1038 = vsel %vm1037, %v1029, %v1034
    %v1039 = vrsqrt.pop %v858
    %v1040 = vmul.f32 %v1039, %v858
    %v1041 = vmul.f32 %v1040, %v1039
    %v1042 = vmul.f32 0.5, %v1041
    %v1043 = vsub.f32 1.5, %v1042
    %v1044 = vmul.f32 %v1039, %v1043
    %vm1045 = vweird.f32 %v858
    %vm1046 = vweird.f32 %v1039
    %vm1047 = vmor %vm1045, %vm1046
    %v1048 = vsel %vm1047, %v1039, %v1044
    %v1049 = vrsqrt.pop %v863
    %v1050 = vmul.f32 %v1049, %v863
    %v1051 = vmul.f32 %v1050, %v1049
    %v1052 = vmul.f32 0.5, %v1051
    %v1053 = vsub.f32 1.5, %v1052
    %v1054 = vmul.f32 %v1049, %v1053
    %vm1055 = vweird.f32 %v863
    %vm1056 = vweird.f32 %v1049
    %vm1057 = vmor %vm1055, %vm1056
    %v1058 = vsel %vm1057, %v1049, %v1054
    %v1059 = vrsqrt.pop %v868
    %v1060 = vmul.f32 %v1059, %v868
    %v1061 = vmul.f32 %v1060, %v1059
    %v1062 = vmul.f32 0.5, %v1061
    %v1063 = vsub.f32 1.5, %v1062
    %v1064 = vmul.f32 %v1059, %v1063
    %vm1065 = vweird.f32 %v868
    %vm1066 = vweird.f32 %v1059
    %vm1067 = vmor %vm1065, %vm1066
    %v1068 = vsel %vm1067, %v1059, %v1064
    %v1069 = vrsqrt.pop %v873
    %v1070 = vmul.f32 %v1069, %v873
    %v1071 = vmul.f32 %v1070, %v1069
    %v1072 = vmul.f32 0.5, %v1071
    %v1073 = vsub.f32 1.5, %v1072
    %v1074 = vmul.f32 %v1069, %v1073
    %vm1075 = vweird.f32 %v873
    %vm1076 = vweird.f32 %v1069
    %vm1077 = vmor %vm1075, %vm1076
    %v1078 = vsel %vm1077, %v1069, %v1074
    %v1079 = vrsqrt.pop %v878
    %v1080 = vmul.f32 %v1079, %v878
    %v1081 = vmul.f32 %v1080, %v1079
    %v1082 = vmul.f32 0.5, %v1081
    %v1083 = vsub.f32 1.5, %v1082
    %v1084 = vmul.f32 %v1079, %v1083
    %vm1085 = vweird.f32 %v878
    %vm1086 = vweird.f32 %v1079
    %vm1087 = vmor %vm1085, %vm1086
    %v1088 = vsel %vm1087, %v1079, %v1084
    %v1089 = vrsqrt.pop %v883
    %v1090 = vmul.f32 %v1089, %v883
    %v1091 = vmul.f32 %v1090, %v1089
    %v1092 = vmul.f32 0.5, %v1091
    %v1093 = vsub.f32 1.5, %v1092
    %v1094 = vmul.f32 %v1089, %v1093
    %vm1095 = vweird.f32 %v883
    %vm1096 = vweird.f32 %v1089
    %vm1097 = vmor %vm1095, %vm1096
    %v1098 = vsel %vm1097, %v1089, %v1094
    %v1099 = vrsqrt.pop %v888
    %v1100 = vmul.f32 %v1099, %v888
    %v1101 = vmul.f32 %v1100, %v1099
    %v1102 = vmul.f32 0.5, %v1101
    %v1103 = vsub.f32 1.5, %v1102
    %v1104 = vmul.f32 %v1099, %v1103
    %vm1105 = vweird.f32 %v888
    %vm1106 = vweird.f32 %v1099
    %vm1107 = vmor %vm1105, %vm1106
    %v1108 = vsel %vm1107, %v1099, %v1104
    %v1109 = vrsqrt.pop %v893
    %v1110 = vmul.f32 %v1109, %v893
    %v1111 = vmul.f32 %v1110, %v1109
    %v1112 = vmul.f32 0.5, %v1111
    %v1113 = vsub.f32 1.5, %v1112
    %v1114 = vmul.f32 %v1109, %v1113
    %vm1115 = vweird.f32 %v893
    %vm1116 = vweird.f32 %v1109
    %vm1117 = vmor %vm1115, %vm1116
    %v1118 = vsel %vm1117, %v1109, %v1114
    %v1119 = vrsqrt.pop %v898
    %v1120 = vmul.f32 %v1119, %v898
    %v1121 = vmul.f32 %v1120, %v1119
    %v1122 = vmul.f32 0.5, %v1121
    %v1123 = vsub.f32 1.5, %v1122
    %v1124 = vmul.f32 %v1119, %v1123
    %vm1125 = vweird.f32 %v898
    %vm1126 = vweird.f32 %v1119
    %vm1127 = vmor %vm1125, %vm1126
    %v1128 = vsel %vm1127, %v1119, %v1124
    %v1129 = vrsqrt.pop %v903
    %v1130 = vmul.f32 %v1129, %v903
    %v1131 = vmul.f32 %v1130, %v1129
    %v1132 = vmul.f32 0.5, %v1131
    %v1133 = vsub.f32 1.5, %v1132
    %v1134 = vmul.f32 %v1129, %v1133
    %vm1135 = vweird.f32 %v903
    %vm1136 = vweird.f32 %v1129
    %vm1137 = vmor %vm1135, %vm1136
    %v1138 = vsel %vm1137, %v1129, %v1134
    %v1139 = vrsqrt.pop %v908
    %v1140 = vmul.f32 %v1139, %v908
    %v1141 = vmul.f32 %v1140, %v1139
    %v1142 = vmul.f32 0.5, %v1141
    %v1143 = vsub.f32 1.5, %v1142
    %v1144 = vmul.f32 %v1139, %v1143
    %vm1145 = vweird.f32 %v908
    %vm1146 = vweird.f32 %v1139
    %vm1147 = vmor %vm1145, %vm1146
    %v1148 = vsel %vm1147, %v1139, %v1144
    %v1149 = vrsqrt.pop %v913
    %v1150 = vmul.f32 %v1149, %v913
    %v1151 = vmul.f32 %v1150, %v1149
    %v1152 = vmul.f32 0.5, %v1151
    %v1153 = vsub.f32 1.5, %v1152
    %v1154 = vmul.f32 %v1149, %v1153
    %vm1155 = vweird.f32 %v913
    %vm1156 = vweird.f32 %v1149
    %vm1157 = vmor %vm1155, %vm1156
    %v1158 = vsel %vm1157, %v1149, %v1154
    %v1159 = vrsqrt.pop %v918
    %v1160 = vmul.f32 %v1159, %v918
    %v1161 = vmul.f32 %v1160, %v1159
    %v1162 = vmul.f32 0.5, %v1161
    %v1163 = vsub.f32 1.5, %v1162
    %v1164 = vmul.f32 %v1159, %v1163
    %vm1165 = vweird.f32 %v918
    %vm1166 = vweird.f32 %v1159
    %vm1167 = vmor %vm1165, %vm1166
    %v1168 = vsel %vm1167, %v1159, %v1164
    %v1169 = vrsqrt.pop %v923
    %v1170 = vmul.f32 %v1169, %v923
    %v1171 = vmul.f32 %v1170, %v1169
    %v1172 = vmul.f32 0.5, %v1171
    %v1173 = vsub.f32 1.5, %v1172
    %v1174 = vmul.f32 %v1169, %v1173
    %vm1175 = vweird.f32 %v923
    %vm1176 = vweird.f32 %v1169
    %vm1177 = vmor %vm1175, %vm1176
    %v1178 = vsel %vm1177, %v1169, %v1174
    %v1179 = vrsqrt.pop %v928
    %v1180 = vmul.f32 %v1179, %v928
    %v1181 = vmul.f32 %v1180, %v1179
    %v1182 = vmul.f32 0.5, %v1181
    %v1183 = vsub.f32 1.5, %v1182
    %v1184 = vmul.f32 %v1179, %v1183
    %vm1185 = vweird.f32 %v928
    %vm1186 = vweird.f32 %v1179
    %vm1187 = vmor %vm1185, %vm1186
    %v1188 = vsel %vm1187, %v1179, %v1184
    %v1189 = vrsqrt.pop %v933
    %v1190 = vmul.f32 %v1189, %v933
    %v1191 = vmul.f32 %v1190, %v1189
    %v1192 = vmul.f32 0.5, %v1191
    %v1193 = vsub.f32 1.5, %v1192
    %v1194 = vmul.f32 %v1189, %v1193
    %vm1195 = vweird.f32 %v933
    %vm1196 = vweird.f32 %v1189
    %vm1197 = vmor %vm1195, %vm1196
    %v1198 = vsel %vm1197, %v1189, %v1194
    %v1199 = vrsqrt.pop %v938
    %v1200 = vmul.f32 %v1199, %v938
    %v1201 = vmul.f32 %v1200, %v1199
    %v1202 = vmul.f32 0.5, %v1201
    %v1203 = vsub.f32 1.5, %v1202
    %v1204 = vmul.f32 %v1199, %v1203
    %vm1205 = vweird.f32 %v938
    %vm1206 = vweird.f32 %v1199
    %vm1207 = vmor %vm1205, %vm1206
    %v1208 = vsel %vm1207, %v1199, %v1204
    %v1209 = vrsqrt.pop %v943
    %v1210 = vmul.f32 %v1209, %v943
    %v1211 = vmul.f32 %v1210, %v1209
    %v1212 = vmul.f32 0.5, %v1211
    %v1213 = vsub.f32 1.5, %v1212
    %v1214 = vmul.f32 %v1209, %v1213
    %vm1215 = vweird.f32 %v943
    %vm1216 = vweird.f32 %v1209
    %vm1217 = vmor %vm1215, %vm1216
    %v1218 = vsel %vm1217, %v1209, %v1214
    %v1219 = vrsqrt.pop %v948
    %v1220 = vmul.f32 %v1219, %v948
    %v1221 = vmul.f32 %v1220, %v1219
    %v1222 = vmul.f32 0.5, %v1221
    %v1223 = vsub.f32 1.5, %v1222
    %v1224 = vmul.f32 %v1219, %v1223
    %vm1225 = vweird.f32 %v948
    %vm1226 = vweird.f32 %v1219
    %vm1227 = vmor %vm1225, %vm1226
    %v1228 = vsel %vm1227, %v1219, %v1224
    %v1229 = vrsqrt.pop %v953
    %v1230 = vmul.f32 %v1229, %v953
    %v1231 = vmul.f32 %v1230, %v1229
    %v1232 = vmul.f32 0.5, %v1231
    %v1233 = vsub.f32 1.5, %v1232
    %v1234 = vmul.f32 %v1229, %v1233
    %vm1235 = vweird.f32 %v953
    %vm1236 = vweird.f32 %v1229
    %vm1237 = vmor %vm1235, %vm1236
    %v1238 = vsel %vm1237, %v1229, %v1234
    %v1239 = vrsqrt.pop %v958
    %v1240 = vmul.f32 %v1239, %v958
    %v1241 = vmul.f32 %v1240, %v1239
    %v1242 = vmul.f32 0.5, %v1241
    %v1243 = vsub.f32 1.5, %v1242
    %v1244 = vmul.f32 %v1239, %v1243
    %vm1245 = vweird.f32 %v958
    %vm1246 = vweird.f32 %v1239
    %vm1247 = vmor %vm1245, %vm1246
    %v1248 = vsel %vm1247, %v1239, %v1244
    %v1249 = vrsqrt.pop %v963
    %v1250 = vmul.f32 %v1249, %v963
    %v1251 = vmul.f32 %v1250, %v1249
    %v1252 = vmul.f32 0.5, %v1251
    %v1253 = vsub.f32 1.5, %v1252
    %v1254 = vmul.f32 %v1249, %v1253
    %vm1255 = vweird.f32 %v963
    %vm1256 = vweird.f32 %v1249
    %vm1257 = vmor %vm1255, %vm1256
    %v1258 = vsel %vm1257, %v1249, %v1254
    %v1259 = vrsqrt.pop %v968
    %v1260 = vmul.f32 %v1259, %v968
    %v1261 = vmul.f32 %v1260, %v1259
    %v1262 = vmul.f32 0.5, %v1261
    %v1263 = vsub.f32 1.5, %v1262
    %v1264 = vmul.f32 %v1259, %v1263
    %vm1265 = vweird.f32 %v968
    %vm1266 = vweird.f32 %v1259
    %vm1267 = vmor %vm1265, %vm1266
    %v1268 = vsel %vm1267, %v1259, %v1264
    %v1269 = vrsqrt.pop %v973
    %v1270 = vmul.f32 %v1269, %v973
    %v1271 = vmul.f32 %v1270, %v1269
    %v1272 = vmul.f32 0.5, %v1271
    %v1273 = vsub.f32 1.5, %v1272
    %v1274 = vmul.f32 %v1269, %v1273
    %vm1275 = vweird.f32 %v973
    %vm1276 = vweird.f32 %v1269
    %vm1277 = vmor %vm1275, %vm1276
    %v1278 = vsel %vm1277, %v1269, %v1274
    %v1279 = vrsqrt.pop %v978
    %v1280 = vmul.f32 %v1279, %v978
    %v1281 = vmul.f32 %v1280, %v1279
    %v1282 = vmul.f32 0.5, %v1281
    %v1283 = vsub.f32 1.5, %v1282
    %v1284 = vmul.f32 %v1279, %v1283
    %vm1285 = vweird.f32 %v978
    %vm1286 = vweird.f32 %v1279
    %vm1287 = vmor %vm1285, %vm1286
    %v1288 = vsel %vm1287, %v1279, %v1284
    %v1289 = vrsqrt.pop %v983
    %v1290 = vmul.f32 %v1289, %v983
    %v1291 = vmul.f32 %v1290, %v1289
    %v1292 = vmul.f32 0.5, %v1291
    %v1293 = vsub.f32 1.5, %v1292
    %v1294 = vmul.f32 %v1289, %v1293
    %vm1295 = vweird.f32 %v983
    %vm1296 = vweird.f32 %v1289
    %vm1297 = vmor %vm1295, %vm1296
    %v1298 = vsel %vm1297, %v1289, %v1294
    %v1299 = vrsqrt.pop %v988
    %v1300 = vmul.f32 %v1299, %v988
    %v1301 = vmul.f32 %v1300, %v1299
    %v1302 = vmul.f32 0.5, %v1301
    %v1303 = vsub.f32 1.5, %v1302
    %v1304 = vmul.f32 %v1299, %v1303
    %vm1305 = vweird.f32 %v988
    %vm1306 = vweird.f32 %v1299
    %vm1307 = vmor %vm1305, %vm1306
    %v1308 = vsel %vm1307, %v1299, %v1304
    %v1309 = vpack.c.bf16 %v577, %v573
    %v1310 = vpack.c.bf16 %v578, %v574
    %v1311 = vpack.c.bf16 %v579, %v575
    %v1312 = vpack.c.bf16 %v580, %v576
    %v1313 = vpack.c.bf16 %v585, %v581
    %v1314 = vpack.c.bf16 %v586, %v582
    %v1315 = vpack.c.bf16 %v587, %v583
    %v1316 = vpack.c.bf16 %v588, %v584
    %v1317 = vpack.c.bf16 %v593, %v589
    %v1318 = vpack.c.bf16 %v594, %v590
    %v1319 = vpack.c.bf16 %v595, %v591
    %v1320 = vpack.c.bf16 %v596, %v592
    %v1321 = vpack.c.bf16 %v601, %v597
    %v1322 = vpack.c.bf16 %v602, %v598
    %v1323 = vpack.c.bf16 %v603, %v599
    %v1324 = vpack.c.bf16 %v604, %v600
    %v1325 = vpack.c.bf16 %v609, %v605
    %v1326 = vpack.c.bf16 %v610, %v606
    %v1327 = vpack.c.bf16 %v611, %v607
    %v1328 = vpack.c.bf16 %v612, %v608
    %v1329 = vpack.c.bf16 %v617, %v613
    %v1330 = vpack.c.bf16 %v618, %v614
    %v1331 = vpack.c.bf16 %v619, %v615
    %v1332 = vpack.c.bf16 %v620, %v616
    %v1333 = vpack.c.bf16 %v625, %v621
    %v1334 = vpack.c.bf16 %v626, %v622
    %v1335 = vpack.c.bf16 %v627, %v623
    %v1336 = vpack.c.bf16 %v628, %v624
    %v1337 = vpack.c.bf16 %v633, %v629
    %v1338 = vpack.c.bf16 %v634, %v630
    %v1339 = vpack.c.bf16 %v635, %v631
    %v1340 = vpack.c.bf16 %v636, %v632
    %v1341 = vpack.c.bf16 %v641, %v637
    %v1342 = vpack.c.bf16 %v642, %v638
    %v1343 = vpack.c.bf16 %v643, %v639
    %v1344 = vpack.c.bf16 %v644, %v640
    %v1345 = vpack.c.bf16 %v649, %v645
    %v1346 = vpack.c.bf16 %v650, %v646
    %v1347 = vpack.c.bf16 %v651, %v647
    %v1348 = vpack.c.bf16 %v652, %v648
    %v1349 = vpack.c.bf16 %v657, %v653
    %v1350 = vpack.c.bf16 %v658, %v654
    %v1351 = vpack.c.bf16 %v659, %v655
    %v1352 = vpack.c.bf16 %v660, %v656
    %v1353 = vpack.c.bf16 %v665, %v661
    %v1354 = vpack.c.bf16 %v666, %v662
    %v1355 = vpack.c.bf16 %v667, %v663
    %v1356 = vpack.c.bf16 %v668, %v664
    %v1357 = vpack.c.bf16 %v673, %v669
    %v1358 = vpack.c.bf16 %v674, %v670
    %v1359 = vpack.c.bf16 %v675, %v671
    %v1360 = vpack.c.bf16 %v676, %v672
    %v1361 = vpack.c.bf16 %v681, %v677
    %v1362 = vpack.c.bf16 %v682, %v678
    %v1363 = vpack.c.bf16 %v683, %v679
    %v1364 = vpack.c.bf16 %v684, %v680
    %v1365 = vpack.c.bf16 %v689, %v685
    %v1366 = vpack.c.bf16 %v690, %v686
    %v1367 = vpack.c.bf16 %v691, %v687
    %v1368 = vpack.c.bf16 %v692, %v688
    %v1369 = vpack.c.bf16 %v697, %v693
    %v1370 = vpack.c.bf16 %v698, %v694
    %v1371 = vpack.c.bf16 %v699, %v695
    %v1372 = vpack.c.bf16 %v700, %v696
    %v1373 = vld [vmem:[#allocation2] sm:$0xf]
    %v1374 = vld [vmem:[#allocation2 + $0x4] sm:$0xf]
    %v1375 = vld [vmem:[#allocation2 + $0x8] sm:$0xf]
    %v1376 = vld [vmem:[#allocation2 + $0xc] sm:$0xf]
    %v1377 = vld [vmem:[#allocation2 + $0x10] sm:$0xf]
    %v1378 = vld [vmem:[#allocation2 + $0x14] sm:$0xf]
    %v1379 = vld [vmem:[#allocation2 + $0x18] sm:$0xf]
    %v1380 = vld [vmem:[#allocation2 + $0x1c] sm:$0xf]
    %v1381 = vld [vmem:[#allocation2 + $0x20] sm:$0xf]
    %v1382 = vld [vmem:[#allocation2 + $0x24] sm:$0xf]
    %v1383 = vld [vmem:[#allocation2 + $0x28] sm:$0xf]
    %v1384 = vld [vmem:[#allocation2 + $0x2c] sm:$0xf]
    %v1385 = vld [vmem:[#allocation2 + $0x30] sm:$0xf]
    %v1386 = vld [vmem:[#allocation2 + $0x34] sm:$0xf]
    %v1387 = vld [vmem:[#allocation2 + $0x38] sm:$0xf]
    %v1388 = vld [vmem:[#allocation2 + $0x3c] sm:$0xf]
    %v1389 = vld [vmem:[#allocation2 + $0x40] sm:$0xf]
    %v1390 = vld [vmem:[#allocation2 + $0x44] sm:$0xf]
    %v1391 = vld [vmem:[#allocation2 + $0x48] sm:$0xf]
    %v1392 = vld [vmem:[#allocation2 + $0x4c] sm:$0xf]
    %v1393 = vld [vmem:[#allocation2 + $0x50] sm:$0xf]
    %v1394 = vld [vmem:[#allocation2 + $0x54] sm:$0xf]
    %v1395 = vld [vmem:[#allocation2 + $0x58] sm:$0xf]
    %v1396 = vld [vmem:[#allocation2 + $0x5c] sm:$0xf]
    %v1397 = vld [vmem:[#allocation2 + $0x60] sm:$0xf]
    %v1398 = vld [vmem:[#allocation2 + $0x64] sm:$0xf]
    %v1399 = vld [vmem:[#allocation2 + $0x68] sm:$0xf]
    %v1400 = vld [vmem:[#allocation2 + $0x6c] sm:$0xf]
    %v1401 = vld [vmem:[#allocation2 + $0x70] sm:$0xf]
    %v1402 = vld [vmem:[#allocation2 + $0x74] sm:$0xf]
    %v1403 = vld [vmem:[#allocation2 + $0x78] sm:$0xf]
    %v1404 = vld [vmem:[#allocation2 + $0x7c] sm:$0xf]
    %v1405 = vld [vmem:[#allocation2 + $0x80] sm:$0xf]
    %v1406 = vld [vmem:[#allocation2 + $0x84] sm:$0xf]
    %v1407 = vld [vmem:[#allocation2 + $0x88] sm:$0xf]
    %v1408 = vld [vmem:[#allocation2 + $0x8c] sm:$0xf]
    %v1409 = vld [vmem:[#allocation2 + $0x90] sm:$0xf]
    %v1410 = vld [vmem:[#allocation2 + $0x94] sm:$0xf]
    %v1411 = vld [vmem:[#allocation2 + $0x98] sm:$0xf]
    %v1412 = vld [vmem:[#allocation2 + $0x9c] sm:$0xf]
    %v1413 = vld [vmem:[#allocation2 + $0xa0] sm:$0xf]
    %v1414 = vld [vmem:[#allocation2 + $0xa4] sm:$0xf]
    %v1415 = vld [vmem:[#allocation2 + $0xa8] sm:$0xf]
    %v1416 = vld [vmem:[#allocation2 + $0xac] sm:$0xf]
    %v1417 = vld [vmem:[#allocation2 + $0xb0] sm:$0xf]
    %v1418 = vld [vmem:[#allocation2 + $0xb4] sm:$0xf]
    %v1419 = vld [vmem:[#allocation2 + $0xb8] sm:$0xf]
    %v1420 = vld [vmem:[#allocation2 + $0xbc] sm:$0xf]
    %v1421 = vld [vmem:[#allocation2 + $0xc0] sm:$0xf]
    %v1422 = vld [vmem:[#allocation2 + $0xc4] sm:$0xf]
    %v1423 = vld [vmem:[#allocation2 + $0xc8] sm:$0xf]
    %v1424 = vld [vmem:[#allocation2 + $0xcc] sm:$0xf]
    %v1425 = vld [vmem:[#allocation2 + $0xd0] sm:$0xf]
    %v1426 = vld [vmem:[#allocation2 + $0xd4] sm:$0xf]
    %v1427 = vld [vmem:[#allocation2 + $0xd8] sm:$0xf]
    %v1428 = vld [vmem:[#allocation2 + $0xdc] sm:$0xf]
    %v1429 = vld [vmem:[#allocation2 + $0xe0] sm:$0xf]
    %v1430 = vld [vmem:[#allocation2 + $0xe4] sm:$0xf]
    %v1431 = vld [vmem:[#allocation2 + $0xe8] sm:$0xf]
    %v1432 = vld [vmem:[#allocation2 + $0xec] sm:$0xf]
    %v1433 = vld [vmem:[#allocation2 + $0xf0] sm:$0xf]
    %v1434 = vld [vmem:[#allocation2 + $0xf4] sm:$0xf]
    %v1435 = vld [vmem:[#allocation2 + $0xf8] sm:$0xf]
    %v1436 = vld [vmem:[#allocation2 + $0xfc] sm:$0xf]
    %v1501 = vunpack.c.l.b16 %v1373
    %v1502 = vunpack.c.l.b16 %v1374
    %v1503 = vunpack.c.l.b16 %v1375
    %v1504 = vunpack.c.l.b16 %v1376
    %v1505 = vunpack.c.l.b16 %v1377
    %v1506 = vunpack.c.l.b16 %v1378
    %v1507 = vunpack.c.l.b16 %v1379
    %v1508 = vunpack.c.l.b16 %v1380
    %v1509 = vunpack.c.l.b16 %v1381
    %v1510 = vunpack.c.l.b16 %v1382
    %v1511 = vunpack.c.l.b16 %v1383
    %v1512 = vunpack.c.l.b16 %v1384
    %v1513 = vunpack.c.l.b16 %v1385
    %v1514 = vunpack.c.l.b16 %v1386
    %v1515 = vunpack.c.l.b16 %v1387
    %v1516 = vunpack.c.l.b16 %v1388
    %v1517 = vunpack.c.l.b16 %v1389
    %v1518 = vunpack.c.l.b16 %v1390
    %v1519 = vunpack.c.l.b16 %v1391
    %v1520 = vunpack.c.l.b16 %v1392
    %v1521 = vunpack.c.l.b16 %v1393
    %v1522 = vunpack.c.l.b16 %v1394
    %v1523 = vunpack.c.l.b16 %v1395
    %v1524 = vunpack.c.l.b16 %v1396
    %v1525 = vunpack.c.l.b16 %v1397
    %v1526 = vunpack.c.l.b16 %v1398
    %v1527 = vunpack.c.l.b16 %v1399
    %v1528 = vunpack.c.l.b16 %v1400
    %v1529 = vunpack.c.l.b16 %v1401
    %v1530 = vunpack.c.l.b16 %v1402
    %v1531 = vunpack.c.l.b16 %v1403
    %v1532 = vunpack.c.l.b16 %v1404
    %v1533 = vunpack.c.l.b16 %v1405
    %v1534 = vunpack.c.l.b16 %v1406
    %v1535 = vunpack.c.l.b16 %v1407
    %v1536 = vunpack.c.l.b16 %v1408
    %v1537 = vunpack.c.l.b16 %v1409
    %v1538 = vunpack.c.l.b16 %v1410
    %v1539 = vunpack.c.l.b16 %v1411
    %v1540 = vunpack.c.l.b16 %v1412
    %v1541 = vunpack.c.l.b16 %v1413
    %v1542 = vunpack.c.l.b16 %v1414
    %v1543 = vunpack.c.l.b16 %v1415
    %v1544 = vunpack.c.l.b16 %v1416
    %v1545 = vunpack.c.l.b16 %v1417
    %v1546 = vunpack.c.l.b16 %v1418
    %v1547 = vunpack.c.l.b16 %v1419
    %v1548 = vunpack.c.l.b16 %v1420
    %v1549 = vunpack.c.l.b16 %v1421
    %v1550 = vunpack.c.l.b16 %v1422
    %v1551 = vunpack.c.l.b16 %v1423
    %v1552 = vunpack.c.l.b16 %v1424
    %v1553 = vunpack.c.l.b16 %v1425
    %v1554 = vunpack.c.l.b16 %v1426
    %v1555 = vunpack.c.l.b16 %v1427
    %v1556 = vunpack.c.l.b16 %v1428
    %v1557 = vunpack.c.l.b16 %v1429
    %v1558 = vunpack.c.l.b16 %v1430
    %v1559 = vunpack.c.l.b16 %v1431
    %v1560 = vunpack.c.l.b16 %v1432
    %v1561 = vunpack.c.l.b16 %v1433
    %v1562 = vunpack.c.l.b16 %v1434
    %v1563 = vunpack.c.l.b16 %v1435
    %v1564 = vunpack.c.l.b16 %v1436
    %v1565 = vpack.c.b16 %v1502, %v1501
    %v1566 = vpack.c.b16 %v1504, %v1503
    %v1567 = vpack.c.b16 %v1506, %v1505
    %v1568 = vpack.c.b16 %v1508, %v1507
    %v1569 = vpack.c.b16 %v1510, %v1509
    %v1570 = vpack.c.b16 %v1512, %v1511
    %v1571 = vpack.c.b16 %v1514, %v1513
    %v1572 = vpack.c.b16 %v1516, %v1515
    %v1573 = vpack.c.b16 %v1518, %v1517
    %v1574 = vpack.c.b16 %v1520, %v1519
    %v1575 = vpack.c.b16 %v1522, %v1521
    %v1576 = vpack.c.b16 %v1524, %v1523
    %v1577 = vpack.c.b16 %v1526, %v1525
    %v1578 = vpack.c.b16 %v1528, %v1527
    %v1579 = vpack.c.b16 %v1530, %v1529
    %v1580 = vpack.c.b16 %v1532, %v1531
    %v1581 = vpack.c.b16 %v1534, %v1533
    %v1582 = vpack.c.b16 %v1536, %v1535
    %v1583 = vpack.c.b16 %v1538, %v1537
    %v1584 = vpack.c.b16 %v1540, %v1539
    %v1585 = vpack.c.b16 %v1542, %v1541
    %v1586 = vpack.c.b16 %v1544, %v1543
    %v1587 = vpack.c.b16 %v1546, %v1545
    %v1588 = vpack.c.b16 %v1548, %v1547
    %v1589 = vpack.c.b16 %v1550, %v1549
    %v1590 = vpack.c.b16 %v1552, %v1551
    %v1591 = vpack.c.b16 %v1554, %v1553
    %v1592 = vpack.c.b16 %v1556, %v1555
    %v1593 = vpack.c.b16 %v1558, %v1557
    %v1594 = vpack.c.b16 %v1560, %v1559
    %v1595 = vpack.c.b16 %v1562, %v1561
    %v1596 = vpack.c.b16 %v1564, %v1563
    %1629 = vmatpush.bf16.msra.mxu0 %v1572
    %1630 = vmatpush.bf16.msra.mxu0 %v1571
    %1631 = vmatpush.bf16.msra.mxu0 %v1570
    %1632 = vmatpush.bf16.msra.mxu0 %v1569
    %1633 = vmatpush.bf16.msra.mxu0 %v1568
    %1634 = vmatpush.bf16.msra.mxu0 %v1567
    %1635 = vmatpush.bf16.msra.mxu0 %v1566
    %1636 = vmatpush.bf16.msra.mxu0 %v1565
    %1637 = vmatmul.bf16.gmra.mxu0 %v1309
    %v1638 = vpop.f32.mrf.mxu0
    %v1639 = vadd.f32 0.0, %v1638
    %v1640 = vpop.f32.mrf.mxu0
    %v1641 = vadd.f32 0.0, %v1640
    %1642 = vmatmul.bf16.gmra.mxu0 %v1313
    %v1643 = vpop.f32.mrf.mxu0
    %v1644 = vadd.f32 0.0, %v1643
    %v1645 = vpop.f32.mrf.mxu0
    %v1646 = vadd.f32 0.0, %v1645
    %1647 = vmatmul.bf16.gmra.mxu0 %v1317
    %v1648 = vpop.f32.mrf.mxu0
    %v1649 = vadd.f32 0.0, %v1648
    %v1650 = vpop.f32.mrf.mxu0
    %v1651 = vadd.f32 0.0, %v1650
    %1652 = vmatmul.bf16.gmra.mxu0 %v1321
    %v1653 = vpop.f32.mrf.mxu0
    %v1654 = vadd.f32 0.0, %v1653
    %v1655 = vpop.f32.mrf.mxu0
    %v1656 = vadd.f32 0.0, %v1655
    %1657 = vmatmul.bf16.gmra.mxu0 %v1325
    %v1658 = vpop.f32.mrf.mxu0
    %v1659 = vadd.f32 0.0, %v1658
    %v1660 = vpop.f32.mrf.mxu0
    %v1661 = vadd.f32 0.0, %v1660
    %1662 = vmatmul.bf16.gmra.mxu0 %v1329
    %v1663 = vpop.f32.mrf.mxu0
    %v1664 = vadd.f32 0.0, %v1663
    %v1665 = vpop.f32.mrf.mxu0
    %v1666 = vadd.f32 0.0, %v1665
    %1667 = vmatmul.bf16.gmra.mxu0 %v1333
    %v1668 = vpop.f32.mrf.mxu0
    %v1669 = vadd.f32 0.0, %v1668
    %v1670 = vpop.f32.mrf.mxu0
    %v1671 = vadd.f32 0.0, %v1670
    %1672 = vmatmul.bf16.gmra.mxu0 %v1337
    %v1673 = vpop.f32.mrf.mxu0
    %v1674 = vadd.f32 0.0, %v1673
    %v1675 = vpop.f32.mrf.mxu0
    %v1676 = vadd.f32 0.0, %v1675
    %1677 = vmatmul.bf16.gmra.mxu0 %v1341
    %v1678 = vpop.f32.mrf.mxu0
    %v1679 = vadd.f32 0.0, %v1678
    %v1680 = vpop.f32.mrf.mxu0
    %v1681 = vadd.f32 0.0, %v1680
    %1682 = vmatmul.bf16.gmra.mxu0 %v1345
    %v1683 = vpop.f32.mrf.mxu0
    %v1684 = vadd.f32 0.0, %v1683
    %v1685 = vpop.f32.mrf.mxu0
    %v1686 = vadd.f32 0.0, %v1685
    %1687 = vmatmul.bf16.gmra.mxu0 %v1349
    %v1688 = vpop.f32.mrf.mxu0
    %v1689 = vadd.f32 0.0, %v1688
    %v1690 = vpop.f32.mrf.mxu0
    %v1691 = vadd.f32 0.0, %v1690
    %1692 = vmatmul.bf16.gmra.mxu0 %v1353
    %v1693 = vpop.f32.mrf.mxu0
    %v1694 = vadd.f32 0.0, %v1693
    %v1695 = vpop.f32.mrf.mxu0
    %v1696 = vadd.f32 0.0, %v1695
    %1697 = vmatmul.bf16.gmra.mxu0 %v1357
    %v1698 = vpop.f32.mrf.mxu0
    %v1699 = vadd.f32 0.0, %v1698
    %v1700 = vpop.f32.mrf.mxu0
    %v1701 = vadd.f32 0.0, %v1700
    %1702 = vmatmul.bf16.gmra.mxu0 %v1361
    %v1703 = vpop.f32.mrf.mxu0
    %v1704 = vadd.f32 0.0, %v1703
    %v1705 = vpop.f32.mrf.mxu0
    %v1706 = vadd.f32 0.0, %v1705
    %1707 = vmatmul.bf16.gmra.mxu0 %v1365
    %v1708 = vpop.f32.mrf.mxu0
    %v1709 = vadd.f32 0.0, %v1708
    %v1710 = vpop.f32.mrf.mxu0
    %v1711 = vadd.f32 0.0, %v1710
    %1712 = vmatmul.bf16.gmra.mxu0 %v1369
    %v1713 = vpop.f32.mrf.mxu0
    %v1714 = vadd.f32 0.0, %v1713
    %v1715 = vpop.f32.mrf.mxu0
    %v1716 = vadd.f32 0.0, %v1715
    %1717 = vdwg.mxu0
    %1718 = vmatpush.bf16.msra.mxu0 %v1580
    %1719 = vmatpush.bf16.msra.mxu0 %v1579
    %1720 = vmatpush.bf16.msra.mxu0 %v1578
    %1721 = vmatpush.bf16.msra.mxu0 %v1577
    %1722 = vmatpush.bf16.msra.mxu0 %v1576
    %1723 = vmatpush.bf16.msra.mxu0 %v1575
    %1724 = vmatpush.bf16.msra.mxu0 %v1574
    %1725 = vmatpush.bf16.msra.mxu0 %v1573
    %1726 = vmatmul.bf16.gmra.mxu0 %v1310
    %v1727 = vpop.f32.mrf.mxu0
    %v1728 = vadd.f32 %v1639, %v1727
    %v1729 = vpop.f32.mrf.mxu0
    %v1730 = vadd.f32 %v1641, %v1729
    %1731 = vmatmul.bf16.gmra.mxu0 %v1314
    %v1732 = vpop.f32.mrf.mxu0
    %v1733 = vadd.f32 %v1644, %v1732
    %v1734 = vpop.f32.mrf.mxu0
    %v1735 = vadd.f32 %v1646, %v1734
    %1736 = vmatmul.bf16.gmra.mxu0 %v1318
    %v1737 = vpop.f32.mrf.mxu0
    %v1738 = vadd.f32 %v1649, %v1737
    %v1739 = vpop.f32.mrf.mxu0
    %v1740 = vadd.f32 %v1651, %v1739
    %1741 = vmatmul.bf16.gmra.mxu0 %v1322
    %v1742 = vpop.f32.mrf.mxu0
    %v1743 = vadd.f32 %v1654, %v1742
    %v1744 = vpop.f32.mrf.mxu0
    %v1745 = vadd.f32 %v1656, %v1744
    %1746 = vmatmul.bf16.gmra.mxu0 %v1326
    %v1747 = vpop.f32.mrf.mxu0
    %v1748 = vadd.f32 %v1659, %v1747
    %v1749 = vpop.f32.mrf.mxu0
    %v1750 = vadd.f32 %v1661, %v1749
    %1751 = vmatmul.bf16.gmra.mxu0 %v1330
    %v1752 = vpop.f32.mrf.mxu0
    %v1753 = vadd.f32 %v1664, %v1752
    %v1754 = vpop.f32.mrf.mxu0
    %v1755 = vadd.f32 %v1666, %v1754
    %1756 = vmatmul.bf16.gmra.mxu0 %v1334
    %v1757 = vpop.f32.mrf.mxu0
    %v1758 = vadd.f32 %v1669, %v1757
    %v1759 = vpop.f32.mrf.mxu0
    %v1760 = vadd.f32 %v1671, %v1759
    %1761 = vmatmul.bf16.gmra.mxu0 %v1338
    %v1762 = vpop.f32.mrf.mxu0
    %v1763 = vadd.f32 %v1674, %v1762
    %v1764 = vpop.f32.mrf.mxu0
    %v1765 = vadd.f32 %v1676, %v1764
    %1766 = vmatmul.bf16.gmra.mxu0 %v1342
    %v1767 = vpop.f32.mrf.mxu0
    %v1768 = vadd.f32 %v1679, %v1767
    %v1769 = vpop.f32.mrf.mxu0
    %v1770 = vadd.f32 %v1681, %v1769
    %1771 = vmatmul.bf16.gmra.mxu0 %v1346
    %v1772 = vpop.f32.mrf.mxu0
    %v1773 = vadd.f32 %v1684, %v1772
    %v1774 = vpop.f32.mrf.mxu0
    %v1775 = vadd.f32 %v1686, %v1774
    %1776 = vmatmul.bf16.gmra.mxu0 %v1350
    %v1777 = vpop.f32.mrf.mxu0
    %v1778 = vadd.f32 %v1689, %v1777
    %v1779 = vpop.f32.mrf.mxu0
    %v1780 = vadd.f32 %v1691, %v1779
    %1781 = vmatmul.bf16.gmra.mxu0 %v1354
    %v1782 = vpop.f32.mrf.mxu0
    %v1783 = vadd.f32 %v1694, %v1782
    %v1784 = vpop.f32.mrf.mxu0
    %v1785 = vadd.f32 %v1696, %v1784
    %1786 = vmatmul.bf16.gmra.mxu0 %v1358
    %v1787 = vpop.f32.mrf.mxu0
    %v1788 = vadd.f32 %v1699, %v1787
    %v1789 = vpop.f32.mrf.mxu0
    %v1790 = vadd.f32 %v1701, %v1789
    %1791 = vmatmul.bf16.gmra.mxu0 %v1362
    %v1792 = vpop.f32.mrf.mxu0
    %v1793 = vadd.f32 %v1704, %v1792
    %v1794 = vpop.f32.mrf.mxu0
    %v1795 = vadd.f32 %v1706, %v1794
    %1796 = vmatmul.bf16.gmra.mxu0 %v1366
    %v1797 = vpop.f32.mrf.mxu0
    %v1798 = vadd.f32 %v1709, %v1797
    %v1799 = vpop.f32.mrf.mxu0
    %v1800 = vadd.f32 %v1711, %v1799
    %1801 = vmatmul.bf16.gmra.mxu0 %v1370
    %v1802 = vpop.f32.mrf.mxu0
    %v1803 = vadd.f32 %v1714, %v1802
    %v1804 = vpop.f32.mrf.mxu0
    %v1805 = vadd.f32 %v1716, %v1804
    %1806 = vdwg.mxu0
    %1807 = vmatpush.bf16.msra.mxu0 %v1588
    %1808 = vmatpush.bf16.msra.mxu0 %v1587
    %1809 = vmatpush.bf16.msra.mxu0 %v1586
    %1810 = vmatpush.bf16.msra.mxu0 %v1585
    %1811 = vmatpush.bf16.msra.mxu0 %v1584
    %1812 = vmatpush.bf16.msra.mxu0 %v1583
    %1813 = vmatpush.bf16.msra.mxu0 %v1582
    %1814 = vmatpush.bf16.msra.mxu0 %v1581
    %1815 = vmatmul.bf16.gmra.mxu0 %v1311
    %v1816 = vpop.f32.mrf.mxu0
    %v1817 = vadd.f32 %v1728, %v1816
    %v1818 = vpop.f32.mrf.mxu0
    %v1819 = vadd.f32 %v1730, %v1818
    %1820 = vmatmul.bf16.gmra.mxu0 %v1315
    %v1821 = vpop.f32.mrf.mxu0
    %v1822 = vadd.f32 %v1733, %v1821
    %v1823 = vpop.f32.mrf.mxu0
    %v1824 = vadd.f32 %v1735, %v1823
    %1825 = vmatmul.bf16.gmra.mxu0 %v1319
    %v1826 = vpop.f32.mrf.mxu0
    %v1827 = vadd.f32 %v1738, %v1826
    %v1828 = vpop.f32.mrf.mxu0
    %v1829 = vadd.f32 %v1740, %v1828
    %1830 = vmatmul.bf16.gmra.mxu0 %v1323
    %v1831 = vpop.f32.mrf.mxu0
    %v1832 = vadd.f32 %v1743, %v1831
    %v1833 = vpop.f32.mrf.mxu0
    %v1834 = vadd.f32 %v1745, %v1833
    %1835 = vmatmul.bf16.gmra.mxu0 %v1327
    %v1836 = vpop.f32.mrf.mxu0
    %v1837 = vadd.f32 %v1748, %v1836
    %v1838 = vpop.f32.mrf.mxu0
    %v1839 = vadd.f32 %v1750, %v1838
    %1840 = vmatmul.bf16.gmra.mxu0 %v1331
    %v1841 = vpop.f32.mrf.mxu0
    %v1842 = vadd.f32 %v1753, %v1841
    %v1843 = vpop.f32.mrf.mxu0
    %v1844 = vadd.f32 %v1755, %v1843
    %1845 = vmatmul.bf16.gmra.mxu0 %v1335
    %v1846 = vpop.f32.mrf.mxu0
    %v1847 = vadd.f32 %v1758, %v1846
    %v1848 = vpop.f32.mrf.mxu0
    %v1849 = vadd.f32 %v1760, %v1848
    %1850 = vmatmul.bf16.gmra.mxu0 %v1339
    %v1851 = vpop.f32.mrf.mxu0
    %v1852 = vadd.f32 %v1763, %v1851
    %v1853 = vpop.f32.mrf.mxu0
    %v1854 = vadd.f32 %v1765, %v1853
    %1855 = vmatmul.bf16.gmra.mxu0 %v1343
    %v1856 = vpop.f32.mrf.mxu0
    %v1857 = vadd.f32 %v1768, %v1856
    %v1858 = vpop.f32.mrf.mxu0
    %v1859 = vadd.f32 %v1770, %v1858
    %1860 = vmatmul.bf16.gmra.mxu0 %v1347
    %v1861 = vpop.f32.mrf.mxu0
    %v1862 = vadd.f32 %v1773, %v1861
    %v1863 = vpop.f32.mrf.mxu0
    %v1864 = vadd.f32 %v1775, %v1863
    %1865 = vmatmul.bf16.gmra.mxu0 %v1351
    %v1866 = vpop.f32.mrf.mxu0
    %v1867 = vadd.f32 %v1778, %v1866
    %v1868 = vpop.f32.mrf.mxu0
    %v1869 = vadd.f32 %v1780, %v1868
    %1870 = vmatmul.bf16.gmra.mxu0 %v1355
    %v1871 = vpop.f32.mrf.mxu0
    %v1872 = vadd.f32 %v1783, %v1871
    %v1873 = vpop.f32.mrf.mxu0
    %v1874 = vadd.f32 %v1785, %v1873
    %1875 = vmatmul.bf16.gmra.mxu0 %v1359
    %v1876 = vpop.f32.mrf.mxu0
    %v1877 = vadd.f32 %v1788, %v1876
    %v1878 = vpop.f32.mrf.mxu0
    %v1879 = vadd.f32 %v1790, %v1878
    %1880 = vmatmul.bf16.gmra.mxu0 %v1363
    %v1881 = vpop.f32.mrf.mxu0
    %v1882 = vadd.f32 %v1793, %v1881
    %v1883 = vpop.f32.mrf.mxu0
    %v1884 = vadd.f32 %v1795, %v1883
    %1885 = vmatmul.bf16.gmra.mxu0 %v1367
    %v1886 = vpop.f32.mrf.mxu0
    %v1887 = vadd.f32 %v1798, %v1886
    %v1888 = vpop.f32.mrf.mxu0
    %v1889 = vadd.f32 %v1800, %v1888
    %1890 = vmatmul.bf16.gmra.mxu0 %v1371
    %v1891 = vpop.f32.mrf.mxu0
    %v1892 = vadd.f32 %v1803, %v1891
    %v1893 = vpop.f32.mrf.mxu0
    %v1894 = vadd.f32 %v1805, %v1893
    %1895 = vdwg.mxu0
    %1896 = vmatpush.bf16.msra.mxu0 %v1596
    %1897 = vmatpush.bf16.msra.mxu0 %v1595
    %1898 = vmatpush.bf16.msra.mxu0 %v1594
    %1899 = vmatpush.bf16.msra.mxu0 %v1593
    %1900 = vmatpush.bf16.msra.mxu0 %v1592
    %1901 = vmatpush.bf16.msra.mxu0 %v1591
    %1902 = vmatpush.bf16.msra.mxu0 %v1590
    %1903 = vmatpush.bf16.msra.mxu0 %v1589
    %1904 = vmatmul.bf16.gmra.mxu0 %v1312
    %v1905 = vpop.f32.mrf.mxu0
    %v1906 = vadd.f32 %v1817, %v1905
    %v1907 = vpop.f32.mrf.mxu0
    %v1908 = vadd.f32 %v1819, %v1907
    %1909 = vmatmul.bf16.gmra.mxu0 %v1316
    %v1910 = vpop.f32.mrf.mxu0
    %v1911 = vadd.f32 %v1822, %v1910
    %v1912 = vpop.f32.mrf.mxu0
    %v1913 = vadd.f32 %v1824, %v1912
    %1914 = vmatmul.bf16.gmra.mxu0 %v1320
    %v1915 = vpop.f32.mrf.mxu0
    %v1916 = vadd.f32 %v1827, %v1915
    %v1917 = vpop.f32.mrf.mxu0
    %v1918 = vadd.f32 %v1829, %v1917
    %1919 = vmatmul.bf16.gmra.mxu0 %v1324
    %v1920 = vpop.f32.mrf.mxu0
    %v1921 = vadd.f32 %v1832, %v1920
    %v1922 = vpop.f32.mrf.mxu0
    %v1923 = vadd.f32 %v1834, %v1922
    %1924 = vmatmul.bf16.gmra.mxu0 %v1328
    %v1925 = vpop.f32.mrf.mxu0
    %v1926 = vadd.f32 %v1837, %v1925
    %v1927 = vpop.f32.mrf.mxu0
    %v1928 = vadd.f32 %v1839, %v1927
    %1929 = vmatmul.bf16.gmra.mxu0 %v1332
    %v1930 = vpop.f32.mrf.mxu0
    %v1931 = vadd.f32 %v1842, %v1930
    %v1932 = vpop.f32.mrf.mxu0
    %v1933 = vadd.f32 %v1844, %v1932
    %1934 = vmatmul.bf16.gmra.mxu0 %v1336
    %v1935 = vpop.f32.mrf.mxu0
    %v1936 = vadd.f32 %v1847, %v1935
    %v1937 = vpop.f32.mrf.mxu0
    %v1938 = vadd.f32 %v1849, %v1937
    %1939 = vmatmul.bf16.gmra.mxu0 %v1340
    %v1940 = vpop.f32.mrf.mxu0
    %v1941 = vadd.f32 %v1852, %v1940
    %v1942 = vpop.f32.mrf.mxu0
    %v1943 = vadd.f32 %v1854, %v1942
    %1944 = vmatmul.bf16.gmra.mxu0 %v1344
    %v1945 = vpop.f32.mrf.mxu0
    %v1946 = vadd.f32 %v1857, %v1945
    %v1947 = vpop.f32.mrf.mxu0
    %v1948 = vadd.f32 %v1859, %v1947
    %1949 = vmatmul.bf16.gmra.mxu0 %v1348
    %v1950 = vpop.f32.mrf.mxu0
    %v1951 = vadd.f32 %v1862, %v1950
    %v1952 = vpop.f32.mrf.mxu0
    %v1953 = vadd.f32 %v1864, %v1952
    %1954 = vmatmul.bf16.gmra.mxu0 %v1352
    %v1955 = vpop.f32.mrf.mxu0
    %v1956 = vadd.f32 %v1867, %v1955
    %v1957 = vpop.f32.mrf.mxu0
    %v1958 = vadd.f32 %v1869, %v1957
    %1959 = vmatmul.bf16.gmra.mxu0 %v1356
    %v1960 = vpop.f32.mrf.mxu0
    %v1961 = vadd.f32 %v1872, %v1960
    %v1962 = vpop.f32.mrf.mxu0
    %v1963 = vadd.f32 %v1874, %v1962
    %1964 = vmatmul.bf16.gmra.mxu0 %v1360
    %v1965 = vpop.f32.mrf.mxu0
    %v1966 = vadd.f32 %v1877, %v1965
    %v1967 = vpop.f32.mrf.mxu0
    %v1968 = vadd.f32 %v1879, %v1967
    %1969 = vmatmul.bf16.gmra.mxu0 %v1364
    %v1970 = vpop.f32.mrf.mxu0
    %v1971 = vadd.f32 %v1882, %v1970
    %v1972 = vpop.f32.mrf.mxu0
    %v1973 = vadd.f32 %v1884, %v1972
    %1974 = vmatmul.bf16.gmra.mxu0 %v1368
    %v1975 = vpop.f32.mrf.mxu0
    %v1976 = vadd.f32 %v1887, %v1975
    %v1977 = vpop.f32.mrf.mxu0
    %v1978 = vadd.f32 %v1889, %v1977
    %1979 = vmatmul.bf16.gmra.mxu0 %v1372
    %v1980 = vpop.f32.mrf.mxu0
    %v1981 = vadd.f32 %v1892, %v1980
    %v1982 = vpop.f32.mrf.mxu0
    %v1983 = vadd.f32 %v1894, %v1982
    %1984 = vdwg.mxu0
    %v1985 = vmul.f32 %v1906, %v998
    %v1986 = vmul.f32 %v1908, %v1008
    %v1987 = vmul.f32 %v1911, %v1018
    %v1988 = vmul.f32 %v1913, %v1028
    %v1989 = vmul.f32 %v1916, %v1038
    %v1990 = vmul.f32 %v1918, %v1048
    %v1991 = vmul.f32 %v1921, %v1058
    %v1992 = vmul.f32 %v1923, %v1068
    %v1993 = vmul.f32 %v1926, %v1078
    %v1994 = vmul.f32 %v1928, %v1088
    %v1995 = vmul.f32 %v1931, %v1098
    %v1996 = vmul.f32 %v1933, %v1108
    %v1997 = vmul.f32 %v1936, %v1118
    %v1998 = vmul.f32 %v1938, %v1128
    %v1999 = vmul.f32 %v1941, %v1138
    %v2000 = vmul.f32 %v1943, %v1148
    %v2001 = vmul.f32 %v1946, %v1158
    %v2002 = vmul.f32 %v1948, %v1168
    %v2003 = vmul.f32 %v1951, %v1178
    %v2004 = vmul.f32 %v1953, %v1188
    %v2005 = vmul.f32 %v1956, %v1198
    %v2006 = vmul.f32 %v1958, %v1208
    %v2007 = vmul.f32 %v1961, %v1218
    %v2008 = vmul.f32 %v1963, %v1228
    %v2009 = vmul.f32 %v1966, %v1238
    %v2010 = vmul.f32 %v1968, %v1248
    %v2011 = vmul.f32 %v1971, %v1258
    %v2012 = vmul.f32 %v1973, %v1268
    %v2013 = vmul.f32 %v1976, %v1278
    %v2014 = vmul.f32 %v1978, %v1288
    %v2015 = vmul.f32 %v1981, %v1298
    %v2016 = vmul.f32 %v1983, %v1308
    %v2017 = vpack.c.bf16 %v1985, %v1985
    %v2018 = vpack.c.bf16 %v1986, %v1986
    %v2019 = vpack.c.bf16 %v1987, %v1987
    %v2020 = vpack.c.bf16 %v1988, %v1988
    %v2021 = vpack.c.bf16 %v1989, %v1989
    %v2022 = vpack.c.bf16 %v1990, %v1990
    %v2023 = vpack.c.bf16 %v1991, %v1991
    %v2024 = vpack.c.bf16 %v1992, %v1992
    %v2025 = vpack.c.bf16 %v1993, %v1993
    %v2026 = vpack.c.bf16 %v1994, %v1994
    %v2027 = vpack.c.bf16 %v1995, %v1995
    %v2028 = vpack.c.bf16 %v1996, %v1996
    %v2029 = vpack.c.bf16 %v1997, %v1997
    %v2030 = vpack.c.bf16 %v1998, %v1998
    %v2031 = vpack.c.bf16 %v1999, %v1999
    %v2032 = vpack.c.bf16 %v2000, %v2000
    %v2033 = vpack.c.bf16 %v2001, %v2001
    %v2034 = vpack.c.bf16 %v2002, %v2002
    %v2035 = vpack.c.bf16 %v2003, %v2003
    %v2036 = vpack.c.bf16 %v2004, %v2004
    %v2037 = vpack.c.bf16 %v2005, %v2005
    %v2038 = vpack.c.bf16 %v2006, %v2006
    %v2039 = vpack.c.bf16 %v2007, %v2007
    %v2040 = vpack.c.bf16 %v2008, %v2008
    %v2041 = vpack.c.bf16 %v2009, %v2009
    %v2042 = vpack.c.bf16 %v2010, %v2010
    %v2043 = vpack.c.bf16 %v2011, %v2011
    %v2044 = vpack.c.bf16 %v2012, %v2012
    %v2045 = vpack.c.bf16 %v2013, %v2013
    %v2046 = vpack.c.bf16 %v2014, %v2014
    %v2047 = vpack.c.bf16 %v2015, %v2015
    %v2048 = vpack.c.bf16 %v2016, %v2016
    %2049 = vst [vmem:[#allocation5] sm:$0xf] %v2017
    %2050 = vst [vmem:[#allocation5 + $0x4] sm:$0xf] %v2018
    %2051 = vst [vmem:[#allocation5 + $0x8] sm:$0xf] %v2019
    %2052 = vst [vmem:[#allocation5 + $0xc] sm:$0xf] %v2020
    %2053 = vst [vmem:[#allocation5 + $0x10] sm:$0xf] %v2021
    %2054 = vst [vmem:[#allocation5 + $0x14] sm:$0xf] %v2022
    %2055 = vst [vmem:[#allocation5 + $0x18] sm:$0xf] %v2023
    %2056 = vst [vmem:[#allocation5 + $0x1c] sm:$0xf] %v2024
    %2057 = vst [vmem:[#allocation5 + $0x20] sm:$0xf] %v2025
    %2058 = vst [vmem:[#allocation5 + $0x24] sm:$0xf] %v2026
    %2059 = vst [vmem:[#allocation5 + $0x28] sm:$0xf] %v2027
    %2060 = vst [vmem:[#allocation5 + $0x2c] sm:$0xf] %v2028
    %2061 = vst [vmem:[#allocation5 + $0x30] sm:$0xf] %v2029
    %2062 = vst [vmem:[#allocation5 + $0x34] sm:$0xf] %v2030
    %2063 = vst [vmem:[#allocation5 + $0x38] sm:$0xf] %v2031
    %2064 = vst [vmem:[#allocation5 + $0x3c] sm:$0xf] %v2032
    %2065 = vst [vmem:[#allocation5 + $0x40] sm:$0xf] %v2033
    %2066 = vst [vmem:[#allocation5 + $0x44] sm:$0xf] %v2034
    %2067 = vst [vmem:[#allocation5 + $0x48] sm:$0xf] %v2035
    %2068 = vst [vmem:[#allocation5 + $0x4c] sm:$0xf] %v2036
    %2069 = vst [vmem:[#allocation5 + $0x50] sm:$0xf] %v2037
    %2070 = vst [vmem:[#allocation5 + $0x54] sm:$0xf] %v2038
    %2071 = vst [vmem:[#allocation5 + $0x58] sm:$0xf] %v2039
    %2072 = vst [vmem:[#allocation5 + $0x5c] sm:$0xf] %v2040
    %2073 = vst [vmem:[#allocation5 + $0x60] sm:$0xf] %v2041
    %2074 = vst [vmem:[#allocation5 + $0x64] sm:$0xf] %v2042
    %2075 = vst [vmem:[#allocation5 + $0x68] sm:$0xf] %v2043
    %2076 = vst [vmem:[#allocation5 + $0x6c] sm:$0xf] %v2044
    %2077 = vst [vmem:[#allocation5 + $0x70] sm:$0xf] %v2045
    %2078 = vst [vmem:[#allocation5 + $0x74] sm:$0xf] %v2046
    %2079 = vst [vmem:[#allocation5 + $0x78] sm:$0xf] %v2047
    %2080 = vst [vmem:[#allocation5 + $0x7c] sm:$0xf] %v2048
    // Predicated region
    $region18: #{tpu_custom_call.1} parent=1 // pred_check
      _
    $region19: #{tpu_custom_call.1} parent=1 // pred_check_branch
      %2082 = sbr.rel (0) target = $region21
    $region20: #{tpu_custom_call.1} parent=1 // pred_region
      %2084 = vsyncadd [#allocation4], 0
      %s2085 = sshll.u32 [#allocation5], 4
      %s2086 = int_to_ptr.vmem [resolvable:$true] %s2085
      %s2087 = sshll.u32 %s3, 4
      %s2088 = int_to_ptr.hbm [resolvable:$true] %s2087
      %2093 = dma.vmem_to_hbm [thread:$0]  %s2086, 2048, %s2088, [#allocation4], 64, 64, 4
    $region21: #{tpu_custom_call.1} parent=1 // pred_fallthru
      _
    // Predicated region
    $region22: #{tpu_custom_call.1} parent=1 // pred_check
      _
    $region23: #{tpu_custom_call.1} parent=1 // pred_check_branch
      %2095 = sbr.rel (0) target = $region25
    $region24: #{tpu_custom_call.1} parent=1 // pred_region
      %2097 = dma.done [#allocation4], 2048
    $region25: #{tpu_custom_call.1} parent=1 // pred_fallthru
      _
    %2098 = vsyncpa [#allocation3], 1
    %2099 = vsyncpa [#allocation4], 1

</llo_original>
